<compile_context>
chip_gen: v7x
topology: tpu7x:2x2x1
jax: 0.10.0
libtpu: 0.0.40
codegen_flags: <defaults>
</compile_context>

<pallas_src>
import functools

import jax
import jax.numpy as jnp
from jax.experimental import pallas as pl
from jax.experimental.pallas import tpu as pltpu


# ----------------------------------------------------------------------------
# Fused bidirectional-LSTM + embedding kernel (single invocation, no grid)
# ----------------------------------------------------------------------------
def _bilstm_fused_kernel(x_ref, wcat_ref, bcat_ref, wef_ref, web_ref, be_ref,
                         out_ref, rows_scr, recf_scr, recb_scr,
                         *, T, B, nIn, H):
    """B here is the (sublane-)padded batch size.

    x_ref    : (T, B, nIn)        f32, fully VMEM-resident
    wcat_ref : (nIn+H, 8H)        [Wih_f^T;Whh_f^T | Wih_b^T;Whh_b^T]
    bcat_ref : (1, 8H)            [b_f | b_b]  (b_ih + b_hh per direction)
    wef_ref  : (H, NP)            top half of W_emb^T, zero-padded to NP lanes
    web_ref  : (H, NP)            bottom half of W_emb^T
    be_ref   : (1, NP)            embedding bias, zero-padded
    out_ref  : (T*B, NP)          lane-dense output slab
    rows_scr : (2B, nIn+H) f32    assembled [x_t|h_f ; x_tb|h_b] rows
    recf_scr : (T*B, H)   f32     forward hidden states, flattened over (t, b)
    recb_scr : (T*B, H)   f32     backward hidden states
    """
    G = 4 * H
    mdt = wcat_ref.dtype                      # MXU input dtype (f32 or bf16)

    # Invariants hoisted out of the (fully unrolled) time loop.
    w_cat = wcat_ref[...]                                    # (nIn+H, 8H)
    bias2 = jnp.broadcast_to(bcat_ref[...], (2 * B, 2 * G))  # (2B, 8H) f32

    h_f = jnp.zeros((B, H), jnp.float32)
    c_f = jnp.zeros((B, H), jnp.float32)
    h_b = jnp.zeros((B, H), jnp.float32)
    c_b = jnp.zeros((B, H), jnp.float32)

    # TODO(synk): for large T replace the full unroll with a T-chunked grid (or
    #             lax.fori_loop with dynamic-slice stores) to bound compile
    #             time and VMEM residency.
    for t in range(T):
        tb = T - 1 - t

        # Assemble [x_t | h_f ; x_tb | h_b] in VMEM with static slice stores
        # (no in-register lane concats needed).
        rows_scr[0:B, 0:nIn] = x_ref[t]
        rows_scr[B:2 * B, 0:nIn] = x_ref[tb]
        rows_scr[0:B, nIn:nIn + H] = h_f
        rows_scr[B:2 * B, nIn:nIn + H] = h_b

        # One MXU push per timestep for BOTH directions:
        #   gboth[:B , :4H] = [x_t  | h_f] @ [Wih_f^T ; Whh_f^T]
        #   gboth[B: , 4H:] = [x_tb | h_b] @ [Wih_b^T ; Whh_b^T]
        # (off-diagonal quadrants are unused.)
        rows = rows_scr[...].astype(mdt)
        gboth = jnp.dot(rows, w_cat,
                        preferred_element_type=jnp.float32) + bias2  # (2B, 8H)

        # Whole-vreg nonlinearities (EUP), then static gate slices
        # (PyTorch gate order: i, f, g, o).
        sg = jax.nn.sigmoid(gboth)
        th = jnp.tanh(gboth)

        i_f = sg[0:B, 0 * H:1 * H]
        f_f = sg[0:B, 1 * H:2 * H]
        g_f = th[0:B, 2 * H:3 * H]
        o_f = sg[0:B, 3 * H:4 * H]
        i_b = sg[B:2 * B, G + 0 * H:G + 1 * H]
        f_b = sg[B:2 * B, G + 1 * H:G + 2 * H]
        g_b = th[B:2 * B, G + 2 * H:G + 3 * H]
        o_b = sg[B:2 * B, G + 3 * H:G + 4 * H]

        c_f = f_f * c_f + i_f * g_f
        h_f = o_f * jnp.tanh(c_f)
        c_b = f_b * c_b + i_b * g_b
        h_b = o_b * jnp.tanh(c_b)

        # Stage hidden states (static slice stores; backward lands at time tb).
        recf_scr[t * B:(t + 1) * B, :] = h_f
        recb_scr[tb * B:(tb + 1) * B, :] = h_b

    # Fused embedding over all T*B rows:
    #   concat([rec_f, rec_b], -1) @ W_emb^T == rec_f @ W_top + rec_b @ W_bot
    # so no in-kernel concat is needed.  Single lane-dense (T*B, NP) HBM store.
    recf = recf_scr[...].astype(wef_ref.dtype)
    recb = recb_scr[...].astype(web_ref.dtype)
    out = (jnp.dot(recf, wef_ref[...], preferred_element_type=jnp.float32)
           + jnp.dot(recb, web_ref[...], preferred_element_type=jnp.float32)
           + be_ref[...])
    out_ref[...] = out.astype(out_ref.dtype)


# ----------------------------------------------------------------------------
# Wrapper: weight prep (transpose / fuse / pad) + pallas_call
# ----------------------------------------------------------------------------
def bidirectional_lstm_forward(x, params, *, mxu_dtype=jnp.float32):
    """x: (T, B, nIn) -> (T, B, nOut), matching BidirectionalLSTM.forward.

    mxu_dtype=jnp.bfloat16 feeds the MXU with bf16 operands (recommended on
    v6e/v7x); accumulation and elementwise gate math stay float32.
    """
    T, B, nIn = x.shape
    H = params["w_hh_f"].shape[1]
    nOut, two_h = params["w_emb"].shape
    assert two_h == 2 * H

    # Row padding: the per-step gate matmul has 2*BP rows (both directions
    # stacked) -> keep it a multiple of the 8-sublane tile.
    BP = -(-max(B, 4) // 4) * 4
    # Lane-dense output width so the only HBM store is an unmasked vst.
    NP = -(-max(nOut, 128) // 128) * 128

    f32 = jnp.float32

    # Per direction: [Wih^T ; Whh^T] -> (nIn+H, 4H); both directions side by
    # side -> (nIn+H, 8H): one MXU push per timestep covers fwd + bwd.
    w_f = jnp.concatenate([params["w_ih_f"].T, params["w_hh_f"].T], axis=0)
    w_b = jnp.concatenate([params["w_ih_b"].T, params["w_hh_b"].T], axis=0)
    w_cat = jnp.concatenate([w_f, w_b], axis=1).astype(mxu_dtype)
    b_cat = jnp.concatenate(
        [params["b_ih_f"] + params["b_hh_f"],
         params["b_ih_b"] + params["b_hh_b"]]).reshape(1, 8 * H).astype(f32)

    # Embedding split into fwd/bwd halves (avoids concatenating rec in-kernel),
    # zero-padded to NP output lanes.
    w_emb_t = params["w_emb"].T.astype(f32)                 # (2H, nOut)
    wef = jnp.zeros((H, NP), f32).at[:, :nOut].set(w_emb_t[:H]).astype(mxu_dtype)
    web = jnp.zeros((H, NP), f32).at[:, :nOut].set(w_emb_t[H:]).astype(mxu_dtype)
    be = jnp.zeros((1, NP), f32).at[:, :nOut].set(params["b_emb"].astype(f32))

    x_p = x.astype(f32)
    if BP != B:
        x_p = jnp.pad(x_p, ((0, 0), (0, BP - B), (0, 0)))

    vmem = pl.BlockSpec(memory_space=pltpu.MemorySpace.VMEM)
    kernel = functools.partial(_bilstm_fused_kernel, T=T, B=BP, nIn=nIn, H=H)

    out_p = pl.pallas_call(
        kernel,
        out_shape=jax.ShapeDtypeStruct((T * BP, NP), f32),
        in_specs=[vmem] * 6,          # everything fully VMEM-resident, no grid
        out_specs=vmem,
        scratch_shapes=[
            pltpu.VMEM((2 * BP, nIn + H), f32),   # assembled [x | h] rows
            pltpu.VMEM((T * BP, H), f32),         # fwd hidden states
            pltpu.VMEM((T * BP, H), f32),         # bwd hidden states
        ],
    )(x_p, w_cat, b_cat, wef, web, be)

    out = out_p.reshape(T, BP, NP)[:, :B, :nOut]
    return out.astype(x.dtype)


# ----------------------------------------------------------------------------
# Pure-JAX reference (for correctness check)
# ----------------------------------------------------------------------------
def _lstm_ref_dir(x, w_ih, w_hh, b_ih, b_hh, reverse):
    H = w_hh.shape[1]
    B = x.shape[1]
    xs = x[::-1] if reverse else x

    def step(carry, x_t):
        h, c = carry
        gates = x_t @ w_ih.T + b_ih + h @ w_hh.T + b_hh
        i, f, g, o = jnp.split(gates, 4, axis=-1)
        i, f, o = jax.nn.sigmoid(i), jax.nn.sigmoid(f), jax.nn.sigmoid(o)
        g = jnp.tanh(g)
        c = f * c + i * g
        h = o * jnp.tanh(c)
        return (h, c), h

    init = (jnp.zeros((B, H), jnp.float32), jnp.zeros((B, H), jnp.float32))
    _, hs = jax.lax.scan(step, init, xs)
    return hs[::-1] if reverse else hs


def reference_forward(x, params):
    T, B, _ = x.shape
    h_f = _lstm_ref_dir(x, params["w_ih_f"], params["w_hh_f"],
                        params["b_ih_f"], params["b_hh_f"], reverse=False)
    h_b = _lstm_ref_dir(x, params["w_ih_b"], params["w_hh_b"],
                        params["b_ih_b"], params["b_hh_b"], reverse=True)
    rec = jnp.concatenate([h_f, h_b], axis=-1).reshape(T * B, -1)
    out = rec @ params["w_emb"].T + params["b_emb"]
    return out.reshape(T, B, -1)


# ----------------------------------------------------------------------------
# Main
# ----------------------------------------------------------------------------
if __name__ == "__main__":
    T, B, nIn, nHidden, nOut = 8, 2, 32, 32, 16

    key = jax.random.PRNGKey(0)
    ks = jax.random.split(key, 12)
    k = 1.0 / jnp.sqrt(jnp.float32(nHidden))

    def uni(kk, shape):
        return jax.random.uniform(kk, shape, jnp.float32, -k, k)

    params = {
        # forward direction (weight_ih_l0 / weight_hh_l0 / biases)
        "w_ih_f": uni(ks[0], (4 * nHidden, nIn)),
        "w_hh_f": uni(ks[1], (4 * nHidden, nHidden)),
        "b_ih_f": uni(ks[2], (4 * nHidden,)),
        "b_hh_f": uni(ks[3], (4 * nHidden,)),
        # backward direction (*_l0_reverse)
        "w_ih_b": uni(ks[4], (4 * nHidden, nIn)),
        "w_hh_b": uni(ks[5], (4 * nHidden, nHidden)),
        "b_ih_b": uni(ks[6], (4 * nHidden,)),
        "b_hh_b": uni(ks[7], (4 * nHidden,)),
        # embedding: Linear(2*nHidden, nOut)
        "w_emb": uni(ks[8], (nOut, 2 * nHidden)),
        "b_emb": uni(ks[9], (nOut,)),
    }

    x = jax.random.normal(ks[10], (T, B, nIn), jnp.float32)

    # Full-precision path: exact check against the scan reference.
    out = bidirectional_lstm_forward(x, params)
    out = jax.block_until_ready(out)

    ref = reference_forward(x, params)
    assert out.shape == (T, B, nOut), out.shape
    assert jnp.allclose(out, ref, atol=1e-4, rtol=1e-4), (
        float(jnp.max(jnp.abs(out - ref))))

    # bf16 MXU-input variant (what you'd run on v6e/v7x); f32 accumulation and
    # f32 gate math are kept, so only a shape / finiteness sanity check here.
    out_bf16 = jax.block_until_ready(
        bidirectional_lstm_forward(x, params, mxu_dtype=jnp.bfloat16))
    assert out_bf16.shape == (T, B, nOut), out_bf16.shape
    assert bool(jnp.all(jnp.isfinite(out_bf16)))

    print("KERNEL_OK")
</pallas_src>

<mosaic_0001>
module attributes {stable_mosaic.version = 11 : i64} {
  func.func @_bilstm_fused_kernel(%arg0: memref<8x4x32xf32, #tpu.memory_space<vmem>>, %arg1: memref<64x256xf32, #tpu.memory_space<vmem>>, %arg2: memref<1x256xf32, #tpu.memory_space<vmem>>, %arg3: memref<32x128xf32, #tpu.memory_space<vmem>>, %arg4: memref<32x128xf32, #tpu.memory_space<vmem>>, %arg5: memref<1x128xf32, #tpu.memory_space<vmem>>, %arg6: memref<32x128xf32, #tpu.memory_space<vmem>>, %arg7: memref<8x64xf32, #tpu.memory_space<vmem>>, %arg8: memref<32x32xf32, #tpu.memory_space<vmem>>, %arg9: memref<32x32xf32, #tpu.memory_space<vmem>>) attributes {dimension_semantics = [], scalar_prefetch = 0 : i64, scratch_operands = 3 : i64, tpu.core_type = #tpu.core_type<tc>} {
    %c0 = arith.constant 0 : index
    %c0_0 = arith.constant 0 : index
    %0 = vector.load %arg1[%c0, %c0_0] : memref<64x256xf32, #tpu.memory_space<vmem>>, vector<64x256xf32>
    %c0_1 = arith.constant 0 : index
    %c0_2 = arith.constant 0 : index
    %1 = vector.load %arg2[%c0_1, %c0_2] : memref<1x256xf32, #tpu.memory_space<vmem>>, vector<1x256xf32>
    %2 = vector.shape_cast %1 : vector<1x256xf32> to vector<1x256xf32>
    %3 = vector.broadcast %2 : vector<1x256xf32> to vector<8x256xf32>
    %cst = arith.constant 0.000000e+00 : f32
    %4 = vector.broadcast %cst : f32 to vector<4x32xf32>
    %cst_3 = arith.constant 0.000000e+00 : f32
    %5 = vector.broadcast %cst_3 : f32 to vector<4x32xf32>
    %cst_4 = arith.constant 0.000000e+00 : f32
    %6 = vector.broadcast %cst_4 : f32 to vector<4x32xf32>
    %cst_5 = arith.constant 0.000000e+00 : f32
    %7 = vector.broadcast %cst_5 : f32 to vector<4x32xf32>
    %c0_6 = arith.constant 0 : index
    %c0_7 = arith.constant 0 : index
    %c0_8 = arith.constant 0 : index
    %8 = vector.load %arg0[%c0_6, %c0_7, %c0_8] : memref<8x4x32xf32, #tpu.memory_space<vmem>>, vector<1x4x32xf32>
    %9 = vector.shape_cast %8 : vector<1x4x32xf32> to vector<4x32xf32>
    %c0_9 = arith.constant 0 : index
    %c0_10 = arith.constant 0 : index
    %10 = vector.load %arg7[%c0_9, %c0_10] : memref<8x64xf32, #tpu.memory_space<vmem>>, vector<4x32xf32>
    tpu.vector_store %arg7[%c0_9, %c0_10], %9 {strides = array<i32>} : memref<8x64xf32, #tpu.memory_space<vmem>>, vector<4x32xf32>,
    %c7 = arith.constant 7 : index
    %c0_11 = arith.constant 0 : index
    %c0_12 = arith.constant 0 : index
    %11 = vector.load %arg0[%c7, %c0_11, %c0_12] : memref<8x4x32xf32, #tpu.memory_space<vmem>>, vector<1x4x32xf32>
    %12 = vector.shape_cast %11 : vector<1x4x32xf32> to vector<4x32xf32>
    %c4 = arith.constant 4 : index
    %c0_13 = arith.constant 0 : index
    %13 = vector.load %arg7[%c4, %c0_13] : memref<8x64xf32, #tpu.memory_space<vmem>>, vector<4x32xf32>
    tpu.vector_store %arg7[%c4, %c0_13], %12 {strides = array<i32>} : memref<8x64xf32, #tpu.memory_space<vmem>>, vector<4x32xf32>,
    %c0_14 = arith.constant 0 : index
    %c32 = arith.constant 32 : index
    %14 = vector.load %arg7[%c0_14, %c32] : memref<8x64xf32, #tpu.memory_space<vmem>>, vector<4x32xf32>
    tpu.vector_store %arg7[%c0_14, %c32], %4 {strides = array<i32>} : memref<8x64xf32, #tpu.memory_space<vmem>>, vector<4x32xf32>,
    %c4_15 = arith.constant 4 : index
    %c32_16 = arith.constant 32 : index
    %15 = vector.load %arg7[%c4_15, %c32_16] : memref<8x64xf32, #tpu.memory_space<vmem>>, vector<4x32xf32>
    tpu.vector_store %arg7[%c4_15, %c32_16], %6 {strides = array<i32>} : memref<8x64xf32, #tpu.memory_space<vmem>>, vector<4x32xf32>,
    %c0_17 = arith.constant 0 : index
    %c0_18 = arith.constant 0 : index
    %16 = vector.load %arg7[%c0_17, %c0_18] : memref<8x64xf32, #tpu.memory_space<vmem>>, vector<8x64xf32>
    %cst_19 = arith.constant dense<0.000000e+00> : vector<8x256xf32>
    %17 = tpu.matmul %16, %0, %cst_19 {dimension_numbers = #tpu.dot_dimension_numbers<[1], [0], [0], [1], [0, 0, 1, 1], [], []>} : vector<8x64xf32>, vector<64x256xf32>, vector<8x256xf32> -> vector<8x256xf32>
    %18 = arith.addf %17, %3 : vector<8x256xf32>
    %19 = arith.negf %18 : vector<8x256xf32>
    %20 = math.exp %19 : vector<8x256xf32>
    %cst_20 = arith.constant 1.000000e+00 : f32
    %21 = vector.broadcast %cst_20 : f32 to vector<8x256xf32>
    %22 = arith.addf %21, %20 : vector<8x256xf32>
    %23 = arith.divf %21, %22 : vector<8x256xf32>
    %24 = math.tanh %18 : vector<8x256xf32>
    %25 = vector.extract_strided_slice %23 {offsets = [0, 0], sizes = [4, 32], strides = [1, 1]} : vector<8x256xf32> to vector<4x32xf32>
    %26 = vector.extract_strided_slice %23 {offsets = [0, 32], sizes = [4, 32], strides = [1, 1]} : vector<8x256xf32> to vector<4x32xf32>
    %27 = vector.extract_strided_slice %24 {offsets = [0, 64], sizes = [4, 32], strides = [1, 1]} : vector<8x256xf32> to vector<4x32xf32>
    %28 = vector.extract_strided_slice %23 {offsets = [0, 96], sizes = [4, 32], strides = [1, 1]} : vector<8x256xf32> to vector<4x32xf32>
    %29 = vector.extract_strided_slice %23 {offsets = [4, 128], sizes = [4, 32], strides = [1, 1]} : vector<8x256xf32> to vector<4x32xf32>
    %30 = vector.extract_strided_slice %23 {offsets = [4, 160], sizes = [4, 32], strides = [1, 1]} : vector<8x256xf32> to vector<4x32xf32>
    %31 = vector.extract_strided_slice %24 {offsets = [4, 192], sizes = [4, 32], strides = [1, 1]} : vector<8x256xf32> to vector<4x32xf32>
    %32 = vector.extract_strided_slice %23 {offsets = [4, 224], sizes = [4, 32], strides = [1, 1]} : vector<8x256xf32> to vector<4x32xf32>
    %33 = arith.mulf %26, %5 : vector<4x32xf32>
    %34 = arith.mulf %25, %27 : vector<4x32xf32>
    %35 = arith.addf %33, %34 : vector<4x32xf32>
    %36 = math.tanh %35 : vector<4x32xf32>
    %37 = arith.mulf %28, %36 : vector<4x32xf32>
    %38 = arith.mulf %30, %7 : vector<4x32xf32>
    %39 = arith.mulf %29, %31 : vector<4x32xf32>
    %40 = arith.addf %38, %39 : vector<4x32xf32>
    %41 = math.tanh %40 : vector<4x32xf32>
    %42 = arith.mulf %32, %41 : vector<4x32xf32>
    %c0_21 = arith.constant 0 : index
    %c0_22 = arith.constant 0 : index
    %43 = vector.load %arg8[%c0_21, %c0_22] : memref<32x32xf32, #tpu.memory_space<vmem>>, vector<4x32xf32>
    tpu.vector_store %arg8[%c0_21, %c0_22], %37 {strides = array<i32>} : memref<32x32xf32, #tpu.memory_space<vmem>>, vector<4x32xf32>,
    %c28 = arith.constant 28 : index
    %c0_23 = arith.constant 0 : index
    %44 = vector.load %arg9[%c28, %c0_23] : memref<32x32xf32, #tpu.memory_space<vmem>>, vector<4x32xf32>
    tpu.vector_store %arg9[%c28, %c0_23], %42 {strides = array<i32>} : memref<32x32xf32, #tpu.memory_space<vmem>>, vector<4x32xf32>,
    %c1 = arith.constant 1 : index
    %c0_24 = arith.constant 0 : index
    %c0_25 = arith.constant 0 : index
    %45 = vector.load %arg0[%c1, %c0_24, %c0_25] : memref<8x4x32xf32, #tpu.memory_space<vmem>>, vector<1x4x32xf32>
    %46 = vector.shape_cast %45 : vector<1x4x32xf32> to vector<4x32xf32>
    %c0_26 = arith.constant 0 : index
    %c0_27 = arith.constant 0 : index
    %47 = vector.load %arg7[%c0_26, %c0_27] : memref<8x64xf32, #tpu.memory_space<vmem>>, vector<4x32xf32>
    tpu.vector_store %arg7[%c0_26, %c0_27], %46 {strides = array<i32>} : memref<8x64xf32, #tpu.memory_space<vmem>>, vector<4x32xf32>,
    %c6 = arith.constant 6 : index
    %c0_28 = arith.constant 0 : index
    %c0_29 = arith.constant 0 : index
    %48 = vector.load %arg0[%c6, %c0_28, %c0_29] : memref<8x4x32xf32, #tpu.memory_space<vmem>>, vector<1x4x32xf32>
    %49 = vector.shape_cast %48 : vector<1x4x32xf32> to vector<4x32xf32>
    %c4_30 = arith.constant 4 : index
    %c0_31 = arith.constant 0 : index
    %50 = vector.load %arg7[%c4_30, %c0_31] : memref<8x64xf32, #tpu.memory_space<vmem>>, vector<4x32xf32>
    tpu.vector_store %arg7[%c4_30, %c0_31], %49 {strides = array<i32>} : memref<8x64xf32, #tpu.memory_space<vmem>>, vector<4x32xf32>,
    %c0_32 = arith.constant 0 : index
    %c32_33 = arith.constant 32 : index
    %51 = vector.load %arg7[%c0_32, %c32_33] : memref<8x64xf32, #tpu.memory_space<vmem>>, vector<4x32xf32>
    tpu.vector_store %arg7[%c0_32, %c32_33], %37 {strides = array<i32>} : memref<8x64xf32, #tpu.memory_space<vmem>>, vector<4x32xf32>,
    %c4_34 = arith.constant 4 : index
    %c32_35 = arith.constant 32 : index
    %52 = vector.load %arg7[%c4_34, %c32_35] : memref<8x64xf32, #tpu.memory_space<vmem>>, vector<4x32xf32>
    tpu.vector_store %arg7[%c4_34, %c32_35], %42 {strides = array<i32>} : memref<8x64xf32, #tpu.memory_space<vmem>>, vector<4x32xf32>,
    %c0_36 = arith.constant 0 : index
    %c0_37 = arith.constant 0 : index
    %53 = vector.load %arg7[%c0_36, %c0_37] : memref<8x64xf32, #tpu.memory_space<vmem>>, vector<8x64xf32>
    %cst_38 = arith.constant dense<0.000000e+00> : vector<8x256xf32>
    %54 = tpu.matmul %53, %0, %cst_38 {dimension_numbers = #tpu.dot_dimension_numbers<[1], [0], [0], [1], [0, 0, 1, 1], [], []>} : vector<8x64xf32>, vector<64x256xf32>, vector<8x256xf32> -> vector<8x256xf32>
    %55 = arith.addf %54, %3 : vector<8x256xf32>
    %56 = arith.negf %55 : vector<8x256xf32>
    %57 = math.exp %56 : vector<8x256xf32>
    %cst_39 = arith.constant 1.000000e+00 : f32
    %58 = vector.broadcast %cst_39 : f32 to vector<8x256xf32>
    %59 = arith.addf %58, %57 : vector<8x256xf32>
    %60 = arith.divf %58, %59 : vector<8x256xf32>
    %61 = math.tanh %55 : vector<8x256xf32>
    %62 = vector.extract_strided_slice %60 {offsets = [0, 0], sizes = [4, 32], strides = [1, 1]} : vector<8x256xf32> to vector<4x32xf32>
    %63 = vector.extract_strided_slice %60 {offsets = [0, 32], sizes = [4, 32], strides = [1, 1]} : vector<8x256xf32> to vector<4x32xf32>
    %64 = vector.extract_strided_slice %61 {offsets = [0, 64], sizes = [4, 32], strides = [1, 1]} : vector<8x256xf32> to vector<4x32xf32>
    %65 = vector.extract_strided_slice %60 {offsets = [0, 96], sizes = [4, 32], strides = [1, 1]} : vector<8x256xf32> to vector<4x32xf32>
    %66 = vector.extract_strided_slice %60 {offsets = [4, 128], sizes = [4, 32], strides = [1, 1]} : vector<8x256xf32> to vector<4x32xf32>
    %67 = vector.extract_strided_slice %60 {offsets = [4, 160], sizes = [4, 32], strides = [1, 1]} : vector<8x256xf32> to vector<4x32xf32>
    %68 = vector.extract_strided_slice %61 {offsets = [4, 192], sizes = [4, 32], strides = [1, 1]} : vector<8x256xf32> to vector<4x32xf32>
    %69 = vector.extract_strided_slice %60 {offsets = [4, 224], sizes = [4, 32], strides = [1, 1]} : vector<8x256xf32> to vector<4x32xf32>
    %70 = arith.mulf %63, %35 : vector<4x32xf32>
    %71 = arith.mulf %62, %64 : vector<4x32xf32>
    %72 = arith.addf %70, %71 : vector<4x32xf32>
    %73 = math.tanh %72 : vector<4x32xf32>
    %74 = arith.mulf %65, %73 : vector<4x32xf32>
    %75 = arith.mulf %67, %40 : vector<4x32xf32>
    %76 = arith.mulf %66, %68 : vector<4x32xf32>
    %77 = arith.addf %75, %76 : vector<4x32xf32>
    %78 = math.tanh %77 : vector<4x32xf32>
    %79 = arith.mulf %69, %78 : vector<4x32xf32>
    %c4_40 = arith.constant 4 : index
    %c0_41 = arith.constant 0 : index
    %80 = vector.load %arg8[%c4_40, %c0_41] : memref<32x32xf32, #tpu.memory_space<vmem>>, vector<4x32xf32>
    tpu.vector_store %arg8[%c4_40, %c0_41], %74 {strides = array<i32>} : memref<32x32xf32, #tpu.memory_space<vmem>>, vector<4x32xf32>,
    %c24 = arith.constant 24 : index
    %c0_42 = arith.constant 0 : index
    %81 = vector.load %arg9[%c24, %c0_42] : memref<32x32xf32, #tpu.memory_space<vmem>>, vector<4x32xf32>
    tpu.vector_store %arg9[%c24, %c0_42], %79 {strides = array<i32>} : memref<32x32xf32, #tpu.memory_space<vmem>>, vector<4x32xf32>,
    %c2 = arith.constant 2 : index
    %c0_43 = arith.constant 0 : index
    %c0_44 = arith.constant 0 : index
    %82 = vector.load %arg0[%c2, %c0_43, %c0_44] : memref<8x4x32xf32, #tpu.memory_space<vmem>>, vector<1x4x32xf32>
    %83 = vector.shape_cast %82 : vector<1x4x32xf32> to vector<4x32xf32>
    %c0_45 = arith.constant 0 : index
    %c0_46 = arith.constant 0 : index
    %84 = vector.load %arg7[%c0_45, %c0_46] : memref<8x64xf32, #tpu.memory_space<vmem>>, vector<4x32xf32>
    tpu.vector_store %arg7[%c0_45, %c0_46], %83 {strides = array<i32>} : memref<8x64xf32, #tpu.memory_space<vmem>>, vector<4x32xf32>,
    %c5 = arith.constant 5 : index
    %c0_47 = arith.constant 0 : index
    %c0_48 = arith.constant 0 : index
    %85 = vector.load %arg0[%c5, %c0_47, %c0_48] : memref<8x4x32xf32, #tpu.memory_space<vmem>>, vector<1x4x32xf32>
    %86 = vector.shape_cast %85 : vector<1x4x32xf32> to vector<4x32xf32>
    %c4_49 = arith.constant 4 : index
    %c0_50 = arith.constant 0 : index
    %87 = vector.load %arg7[%c4_49, %c0_50] : memref<8x64xf32, #tpu.memory_space<vmem>>, vector<4x32xf32>
    tpu.vector_store %arg7[%c4_49, %c0_50], %86 {strides = array<i32>} : memref<8x64xf32, #tpu.memory_space<vmem>>, vector<4x32xf32>,
    %c0_51 = arith.constant 0 : index
    %c32_52 = arith.constant 32 : index
    %88 = vector.load %arg7[%c0_51, %c32_52] : memref<8x64xf32, #tpu.memory_space<vmem>>, vector<4x32xf32>
    tpu.vector_store %arg7[%c0_51, %c32_52], %74 {strides = array<i32>} : memref<8x64xf32, #tpu.memory_space<vmem>>, vector<4x32xf32>,
    %c4_53 = arith.constant 4 : index
    %c32_54 = arith.constant 32 : index
    %89 = vector.load %arg7[%c4_53, %c32_54] : memref<8x64xf32, #tpu.memory_space<vmem>>, vector<4x32xf32>
    tpu.vector_store %arg7[%c4_53, %c32_54], %79 {strides = array<i32>} : memref<8x64xf32, #tpu.memory_space<vmem>>, vector<4x32xf32>,
    %c0_55 = arith.constant 0 : index
    %c0_56 = arith.constant 0 : index
    %90 = vector.load %arg7[%c0_55, %c0_56] : memref<8x64xf32, #tpu.memory_space<vmem>>, vector<8x64xf32>
    %cst_57 = arith.constant dense<0.000000e+00> : vector<8x256xf32>
    %91 = tpu.matmul %90, %0, %cst_57 {dimension_numbers = #tpu.dot_dimension_numbers<[1], [0], [0], [1], [0, 0, 1, 1], [], []>} : vector<8x64xf32>, vector<64x256xf32>, vector<8x256xf32> -> vector<8x256xf32>
    %92 = arith.addf %91, %3 : vector<8x256xf32>
    %93 = arith.negf %92 : vector<8x256xf32>
    %94 = math.exp %93 : vector<8x256xf32>
    %cst_58 = arith.constant 1.000000e+00 : f32
    %95 = vector.broadcast %cst_58 : f32 to vector<8x256xf32>
    %96 = arith.addf %95, %94 : vector<8x256xf32>
    %97 = arith.divf %95, %96 : vector<8x256xf32>
    %98 = math.tanh %92 : vector<8x256xf32>
    %99 = vector.extract_strided_slice %97 {offsets = [0, 0], sizes = [4, 32], strides = [1, 1]} : vector<8x256xf32> to vector<4x32xf32>
    %100 = vector.extract_strided_slice %97 {offsets = [0, 32], sizes = [4, 32], strides = [1, 1]} : vector<8x256xf32> to vector<4x32xf32>
    %101 = vector.extract_strided_slice %98 {offsets = [0, 64], sizes = [4, 32], strides = [1, 1]} : vector<8x256xf32> to vector<4x32xf32>
    %102 = vector.extract_strided_slice %97 {offsets = [0, 96], sizes = [4, 32], strides = [1, 1]} : vector<8x256xf32> to vector<4x32xf32>
    %103 = vector.extract_strided_slice %97 {offsets = [4, 128], sizes = [4, 32], strides = [1, 1]} : vector<8x256xf32> to vector<4x32xf32>
    %104 = vector.extract_strided_slice %97 {offsets = [4, 160], sizes = [4, 32], strides = [1, 1]} : vector<8x256xf32> to vector<4x32xf32>
    %105 = vector.extract_strided_slice %98 {offsets = [4, 192], sizes = [4, 32], strides = [1, 1]} : vector<8x256xf32> to vector<4x32xf32>
    %106 = vector.extract_strided_slice %97 {offsets = [4, 224], sizes = [4, 32], strides = [1, 1]} : vector<8x256xf32> to vector<4x32xf32>
    %107 = arith.mulf %100, %72 : vector<4x32xf32>
    %108 = arith.mulf %99, %101 : vector<4x32xf32>
    %109 = arith.addf %107, %108 : vector<4x32xf32>
    %110 = math.tanh %109 : vector<4x32xf32>
    %111 = arith.mulf %102, %110 : vector<4x32xf32>
    %112 = arith.mulf %104, %77 : vector<4x32xf32>
    %113 = arith.mulf %103, %105 : vector<4x32xf32>
    %114 = arith.addf %112, %113 : vector<4x32xf32>
    %115 = math.tanh %114 : vector<4x32xf32>
    %116 = arith.mulf %106, %115 : vector<4x32xf32>
    %c8 = arith.constant 8 : index
    %c0_59 = arith.constant 0 : index
    %117 = vector.load %arg8[%c8, %c0_59] : memref<32x32xf32, #tpu.memory_space<vmem>>, vector<4x32xf32>
    tpu.vector_store %arg8[%c8, %c0_59], %111 {strides = array<i32>} : memref<32x32xf32, #tpu.memory_space<vmem>>, vector<4x32xf32>,
    %c20 = arith.constant 20 : index
    %c0_60 = arith.constant 0 : index
    %118 = vector.load %arg9[%c20, %c0_60] : memref<32x32xf32, #tpu.memory_space<vmem>>, vector<4x32xf32>
    tpu.vector_store %arg9[%c20, %c0_60], %116 {strides = array<i32>} : memref<32x32xf32, #tpu.memory_space<vmem>>, vector<4x32xf32>,
    %c3 = arith.constant 3 : index
    %c0_61 = arith.constant 0 : index
    %c0_62 = arith.constant 0 : index
    %119 = vector.load %arg0[%c3, %c0_61, %c0_62] : memref<8x4x32xf32, #tpu.memory_space<vmem>>, vector<1x4x32xf32>
    %120 = vector.shape_cast %119 : vector<1x4x32xf32> to vector<4x32xf32>
    %c0_63 = arith.constant 0 : index
    %c0_64 = arith.constant 0 : index
    %121 = vector.load %arg7[%c0_63, %c0_64] : memref<8x64xf32, #tpu.memory_space<vmem>>, vector<4x32xf32>
    tpu.vector_store %arg7[%c0_63, %c0_64], %120 {strides = array<i32>} : memref<8x64xf32, #tpu.memory_space<vmem>>, vector<4x32xf32>,
    %c4_65 = arith.constant 4 : index
    %c0_66 = arith.constant 0 : index
    %c0_67 = arith.constant 0 : index
    %122 = vector.load %arg0[%c4_65, %c0_66, %c0_67] : memref<8x4x32xf32, #tpu.memory_space<vmem>>, vector<1x4x32xf32>
    %123 = vector.shape_cast %122 : vector<1x4x32xf32> to vector<4x32xf32>
    %c4_68 = arith.constant 4 : index
    %c0_69 = arith.constant 0 : index
    %124 = vector.load %arg7[%c4_68, %c0_69] : memref<8x64xf32, #tpu.memory_space<vmem>>, vector<4x32xf32>
    tpu.vector_store %arg7[%c4_68, %c0_69], %123 {strides = array<i32>} : memref<8x64xf32, #tpu.memory_space<vmem>>, vector<4x32xf32>,
    %c0_70 = arith.constant 0 : index
    %c32_71 = arith.constant 32 : index
    %125 = vector.load %arg7[%c0_70, %c32_71] : memref<8x64xf32, #tpu.memory_space<vmem>>, vector<4x32xf32>
    tpu.vector_store %arg7[%c0_70, %c32_71], %111 {strides = array<i32>} : memref<8x64xf32, #tpu.memory_space<vmem>>, vector<4x32xf32>,
    %c4_72 = arith.constant 4 : index
    %c32_73 = arith.constant 32 : index
    %126 = vector.load %arg7[%c4_72, %c32_73] : memref<8x64xf32, #tpu.memory_space<vmem>>, vector<4x32xf32>
    tpu.vector_store %arg7[%c4_72, %c32_73], %116 {strides = array<i32>} : memref<8x64xf32, #tpu.memory_space<vmem>>, vector<4x32xf32>,
    %c0_74 = arith.constant 0 : index
    %c0_75 = arith.constant 0 : index
    %127 = vector.load %arg7[%c0_74, %c0_75] : memref<8x64xf32, #tpu.memory_space<vmem>>, vector<8x64xf32>
    %cst_76 = arith.constant dense<0.000000e+00> : vector<8x256xf32>
    %128 = tpu.matmul %127, %0, %cst_76 {dimension_numbers = #tpu.dot_dimension_numbers<[1], [0], [0], [1], [0, 0, 1, 1], [], []>} : vector<8x64xf32>, vector<64x256xf32>, vector<8x256xf32> -> vector<8x256xf32>
    %129 = arith.addf %128, %3 : vector<8x256xf32>
    %130 = arith.negf %129 : vector<8x256xf32>
    %131 = math.exp %130 : vector<8x256xf32>
    %cst_77 = arith.constant 1.000000e+00 : f32
    %132 = vector.broadcast %cst_77 : f32 to vector<8x256xf32>
    %133 = arith.addf %132, %131 : vector<8x256xf32>
    %134 = arith.divf %132, %133 : vector<8x256xf32>
    %135 = math.tanh %129 : vector<8x256xf32>
    %136 = vector.extract_strided_slice %134 {offsets = [0, 0], sizes = [4, 32], strides = [1, 1]} : vector<8x256xf32> to vector<4x32xf32>
    %137 = vector.extract_strided_slice %134 {offsets = [0, 32], sizes = [4, 32], strides = [1, 1]} : vector<8x256xf32> to vector<4x32xf32>
    %138 = vector.extract_strided_slice %135 {offsets = [0, 64], sizes = [4, 32], strides = [1, 1]} : vector<8x256xf32> to vector<4x32xf32>
    %139 = vector.extract_strided_slice %134 {offsets = [0, 96], sizes = [4, 32], strides = [1, 1]} : vector<8x256xf32> to vector<4x32xf32>
    %140 = vector.extract_strided_slice %134 {offsets = [4, 128], sizes = [4, 32], strides = [1, 1]} : vector<8x256xf32> to vector<4x32xf32>
    %141 = vector.extract_strided_slice %134 {offsets = [4, 160], sizes = [4, 32], strides = [1, 1]} : vector<8x256xf32> to vector<4x32xf32>
    %142 = vector.extract_strided_slice %135 {offsets = [4, 192], sizes = [4, 32], strides = [1, 1]} : vector<8x256xf32> to vector<4x32xf32>
    %143 = vector.extract_strided_slice %134 {offsets = [4, 224], sizes = [4, 32], strides = [1, 1]} : vector<8x256xf32> to vector<4x32xf32>
    %144 = arith.mulf %137, %109 : vector<4x32xf32>
    %145 = arith.mulf %136, %138 : vector<4x32xf32>
    %146 = arith.addf %144, %145 : vector<4x32xf32>
    %147 = math.tanh %146 : vector<4x32xf32>
    %148 = arith.mulf %139, %147 : vector<4x32xf32>
    %149 = arith.mulf %141, %114 : vector<4x32xf32>
    %150 = arith.mulf %140, %142 : vector<4x32xf32>
    %151 = arith.addf %149, %150 : vector<4x32xf32>
    %152 = math.tanh %151 : vector<4x32xf32>
    %153 = arith.mulf %143, %152 : vector<4x32xf32>
    %c12 = arith.constant 12 : index
    %c0_78 = arith.constant 0 : index
    %154 = vector.load %arg8[%c12, %c0_78] : memref<32x32xf32, #tpu.memory_space<vmem>>, vector<4x32xf32>
    tpu.vector_store %arg8[%c12, %c0_78], %148 {strides = array<i32>} : memref<32x32xf32, #tpu.memory_space<vmem>>, vector<4x32xf32>,
    %c16 = arith.constant 16 : index
    %c0_79 = arith.constant 0 : index
    %155 = vector.load %arg9[%c16, %c0_79] : memref<32x32xf32, #tpu.memory_space<vmem>>, vector<4x32xf32>
    tpu.vector_store %arg9[%c16, %c0_79], %153 {strides = array<i32>} : memref<32x32xf32, #tpu.memory_space<vmem>>, vector<4x32xf32>,
    %c4_80 = arith.constant 4 : index
    %c0_81 = arith.constant 0 : index
    %c0_82 = arith.constant 0 : index
    %156 = vector.load %arg0[%c4_80, %c0_81, %c0_82] : memref<8x4x32xf32, #tpu.memory_space<vmem>>, vector<1x4x32xf32>
    %157 = vector.shape_cast %156 : vector<1x4x32xf32> to vector<4x32xf32>
    %c0_83 = arith.constant 0 : index
    %c0_84 = arith.constant 0 : index
    %158 = vector.load %arg7[%c0_83, %c0_84] : memref<8x64xf32, #tpu.memory_space<vmem>>, vector<4x32xf32>
    tpu.vector_store %arg7[%c0_83, %c0_84], %157 {strides = array<i32>} : memref<8x64xf32, #tpu.memory_space<vmem>>, vector<4x32xf32>,
    %c3_85 = arith.constant 3 : index
    %c0_86 = arith.constant 0 : index
    %c0_87 = arith.constant 0 : index
    %159 = vector.load %arg0[%c3_85, %c0_86, %c0_87] : memref<8x4x32xf32, #tpu.memory_space<vmem>>, vector<1x4x32xf32>
    %160 = vector.shape_cast %159 : vector<1x4x32xf32> to vector<4x32xf32>
    %c4_88 = arith.constant 4 : index
    %c0_89 = arith.constant 0 : index
    %161 = vector.load %arg7[%c4_88, %c0_89] : memref<8x64xf32, #tpu.memory_space<vmem>>, vector<4x32xf32>
    tpu.vector_store %arg7[%c4_88, %c0_89], %160 {strides = array<i32>} : memref<8x64xf32, #tpu.memory_space<vmem>>, vector<4x32xf32>,
    %c0_90 = arith.constant 0 : index
    %c32_91 = arith.constant 32 : index
    %162 = vector.load %arg7[%c0_90, %c32_91] : memref<8x64xf32, #tpu.memory_space<vmem>>, vector<4x32xf32>
    tpu.vector_store %arg7[%c0_90, %c32_91], %148 {strides = array<i32>} : memref<8x64xf32, #tpu.memory_space<vmem>>, vector<4x32xf32>,
    %c4_92 = arith.constant 4 : index
    %c32_93 = arith.constant 32 : index
    %163 = vector.load %arg7[%c4_92, %c32_93] : memref<8x64xf32, #tpu.memory_space<vmem>>, vector<4x32xf32>
    tpu.vector_store %arg7[%c4_92, %c32_93], %153 {strides = array<i32>} : memref<8x64xf32, #tpu.memory_space<vmem>>, vector<4x32xf32>,
    %c0_94 = arith.constant 0 : index
    %c0_95 = arith.constant 0 : index
    %164 = vector.load %arg7[%c0_94, %c0_95] : memref<8x64xf32, #tpu.memory_space<vmem>>, vector<8x64xf32>
    %cst_96 = arith.constant dense<0.000000e+00> : vector<8x256xf32>
    %165 = tpu.matmul %164, %0, %cst_96 {dimension_numbers = #tpu.dot_dimension_numbers<[1], [0], [0], [1], [0, 0, 1, 1], [], []>} : vector<8x64xf32>, vector<64x256xf32>, vector<8x256xf32> -> vector<8x256xf32>
    %166 = arith.addf %165, %3 : vector<8x256xf32>
    %167 = arith.negf %166 : vector<8x256xf32>
    %168 = math.exp %167 : vector<8x256xf32>
    %cst_97 = arith.constant 1.000000e+00 : f32
    %169 = vector.broadcast %cst_97 : f32 to vector<8x256xf32>
    %170 = arith.addf %169, %168 : vector<8x256xf32>
    %171 = arith.divf %169, %170 : vector<8x256xf32>
    %172 = math.tanh %166 : vector<8x256xf32>
    %173 = vector.extract_strided_slice %171 {offsets = [0, 0], sizes = [4, 32], strides = [1, 1]} : vector<8x256xf32> to vector<4x32xf32>
    %174 = vector.extract_strided_slice %171 {offsets = [0, 32], sizes = [4, 32], strides = [1, 1]} : vector<8x256xf32> to vector<4x32xf32>
    %175 = vector.extract_strided_slice %172 {offsets = [0, 64], sizes = [4, 32], strides = [1, 1]} : vector<8x256xf32> to vector<4x32xf32>
    %176 = vector.extract_strided_slice %171 {offsets = [0, 96], sizes = [4, 32], strides = [1, 1]} : vector<8x256xf32> to vector<4x32xf32>
    %177 = vector.extract_strided_slice %171 {offsets = [4, 128], sizes = [4, 32], strides = [1, 1]} : vector<8x256xf32> to vector<4x32xf32>
    %178 = vector.extract_strided_slice %171 {offsets = [4, 160], sizes = [4, 32], strides = [1, 1]} : vector<8x256xf32> to vector<4x32xf32>
    %179 = vector.extract_strided_slice %172 {offsets = [4, 192], sizes = [4, 32], strides = [1, 1]} : vector<8x256xf32> to vector<4x32xf32>
    %180 = vector.extract_strided_slice %171 {offsets = [4, 224], sizes = [4, 32], strides = [1, 1]} : vector<8x256xf32> to vector<4x32xf32>
    %181 = arith.mulf %174, %146 : vector<4x32xf32>
    %182 = arith.mulf %173, %175 : vector<4x32xf32>
    %183 = arith.addf %181, %182 : vector<4x32xf32>
    %184 = math.tanh %183 : vector<4x32xf32>
    %185 = arith.mulf %176, %184 : vector<4x32xf32>
    %186 = arith.mulf %178, %151 : vector<4x32xf32>
    %187 = arith.mulf %177, %179 : vector<4x32xf32>
    %188 = arith.addf %186, %187 : vector<4x32xf32>
    %189 = math.tanh %188 : vector<4x32xf32>
    %190 = arith.mulf %180, %189 : vector<4x32xf32>
    %c16_98 = arith.constant 16 : index
    %c0_99 = arith.constant 0 : index
    %191 = vector.load %arg8[%c16_98, %c0_99] : memref<32x32xf32, #tpu.memory_space<vmem>>, vector<4x32xf32>
    tpu.vector_store %arg8[%c16_98, %c0_99], %185 {strides = array<i32>} : memref<32x32xf32, #tpu.memory_space<vmem>>, vector<4x32xf32>,
    %c12_100 = arith.constant 12 : index
    %c0_101 = arith.constant 0 : index
    %192 = vector.load %arg9[%c12_100, %c0_101] : memref<32x32xf32, #tpu.memory_space<vmem>>, vector<4x32xf32>
    tpu.vector_store %arg9[%c12_100, %c0_101], %190 {strides = array<i32>} : memref<32x32xf32, #tpu.memory_space<vmem>>, vector<4x32xf32>,
    %c5_102 = arith.constant 5 : index
    %c0_103 = arith.constant 0 : index
    %c0_104 = arith.constant 0 : index
    %193 = vector.load %arg0[%c5_102, %c0_103, %c0_104] : memref<8x4x32xf32, #tpu.memory_space<vmem>>, vector<1x4x32xf32>
    %194 = vector.shape_cast %193 : vector<1x4x32xf32> to vector<4x32xf32>
    %c0_105 = arith.constant 0 : index
    %c0_106 = arith.constant 0 : index
    %195 = vector.load %arg7[%c0_105, %c0_106] : memref<8x64xf32, #tpu.memory_space<vmem>>, vector<4x32xf32>
    tpu.vector_store %arg7[%c0_105, %c0_106], %194 {strides = array<i32>} : memref<8x64xf32, #tpu.memory_space<vmem>>, vector<4x32xf32>,
    %c2_107 = arith.constant 2 : index
    %c0_108 = arith.constant 0 : index
    %c0_109 = arith.constant 0 : index
    %196 = vector.load %arg0[%c2_107, %c0_108, %c0_109] : memref<8x4x32xf32, #tpu.memory_space<vmem>>, vector<1x4x32xf32>
    %197 = vector.shape_cast %196 : vector<1x4x32xf32> to vector<4x32xf32>
    %c4_110 = arith.constant 4 : index
    %c0_111 = arith.constant 0 : index
    %198 = vector.load %arg7[%c4_110, %c0_111] : memref<8x64xf32, #tpu.memory_space<vmem>>, vector<4x32xf32>
    tpu.vector_store %arg7[%c4_110, %c0_111], %197 {strides = array<i32>} : memref<8x64xf32, #tpu.memory_space<vmem>>, vector<4x32xf32>,
    %c0_112 = arith.constant 0 : index
    %c32_113 = arith.constant 32 : index
    %199 = vector.load %arg7[%c0_112, %c32_113] : memref<8x64xf32, #tpu.memory_space<vmem>>, vector<4x32xf32>
    tpu.vector_store %arg7[%c0_112, %c32_113], %185 {strides = array<i32>} : memref<8x64xf32, #tpu.memory_space<vmem>>, vector<4x32xf32>,
    %c4_114 = arith.constant 4 : index
    %c32_115 = arith.constant 32 : index
    %200 = vector.load %arg7[%c4_114, %c32_115] : memref<8x64xf32, #tpu.memory_space<vmem>>, vector<4x32xf32>
    tpu.vector_store %arg7[%c4_114, %c32_115], %190 {strides = array<i32>} : memref<8x64xf32, #tpu.memory_space<vmem>>, vector<4x32xf32>,
    %c0_116 = arith.constant 0 : index
    %c0_117 = arith.constant 0 : index
    %201 = vector.load %arg7[%c0_116, %c0_117] : memref<8x64xf32, #tpu.memory_space<vmem>>, vector<8x64xf32>
    %cst_118 = arith.constant dense<0.000000e+00> : vector<8x256xf32>
    %202 = tpu.matmul %201, %0, %cst_118 {dimension_numbers = #tpu.dot_dimension_numbers<[1], [0], [0], [1], [0, 0, 1, 1], [], []>} : vector<8x64xf32>, vector<64x256xf32>, vector<8x256xf32> -> vector<8x256xf32>
    %203 = arith.addf %202, %3 : vector<8x256xf32>
    %204 = arith.negf %203 : vector<8x256xf32>
    %205 = math.exp %204 : vector<8x256xf32>
    %cst_119 = arith.constant 1.000000e+00 : f32
    %206 = vector.broadcast %cst_119 : f32 to vector<8x256xf32>
    %207 = arith.addf %206, %205 : vector<8x256xf32>
    %208 = arith.divf %206, %207 : vector<8x256xf32>
    %209 = math.tanh %203 : vector<8x256xf32>
    %210 = vector.extract_strided_slice %208 {offsets = [0, 0], sizes = [4, 32], strides = [1, 1]} : vector<8x256xf32> to vector<4x32xf32>
    %211 = vector.extract_strided_slice %208 {offsets = [0, 32], sizes = [4, 32], strides = [1, 1]} : vector<8x256xf32> to vector<4x32xf32>
    %212 = vector.extract_strided_slice %209 {offsets = [0, 64], sizes = [4, 32], strides = [1, 1]} : vector<8x256xf32> to vector<4x32xf32>
    %213 = vector.extract_strided_slice %208 {offsets = [0, 96], sizes = [4, 32], strides = [1, 1]} : vector<8x256xf32> to vector<4x32xf32>
    %214 = vector.extract_strided_slice %208 {offsets = [4, 128], sizes = [4, 32], strides = [1, 1]} : vector<8x256xf32> to vector<4x32xf32>
    %215 = vector.extract_strided_slice %208 {offsets = [4, 160], sizes = [4, 32], strides = [1, 1]} : vector<8x256xf32> to vector<4x32xf32>
    %216 = vector.extract_strided_slice %209 {offsets = [4, 192], sizes = [4, 32], strides = [1, 1]} : vector<8x256xf32> to vector<4x32xf32>
    %217 = vector.extract_strided_slice %208 {offsets = [4, 224], sizes = [4, 32], strides = [1, 1]} : vector<8x256xf32> to vector<4x32xf32>
    %218 = arith.mulf %211, %183 : vector<4x32xf32>
    %219 = arith.mulf %210, %212 : vector<4x32xf32>
    %220 = arith.addf %218, %219 : vector<4x32xf32>
    %221 = math.tanh %220 : vector<4x32xf32>
    %222 = arith.mulf %213, %221 : vector<4x32xf32>
    %223 = arith.mulf %215, %188 : vector<4x32xf32>
    %224 = arith.mulf %214, %216 : vector<4x32xf32>
    %225 = arith.addf %223, %224 : vector<4x32xf32>
    %226 = math.tanh %225 : vector<4x32xf32>
    %227 = arith.mulf %217, %226 : vector<4x32xf32>
    %c20_120 = arith.constant 20 : index
    %c0_121 = arith.constant 0 : index
    %228 = vector.load %arg8[%c20_120, %c0_121] : memref<32x32xf32, #tpu.memory_space<vmem>>, vector<4x32xf32>
    tpu.vector_store %arg8[%c20_120, %c0_121], %222 {strides = array<i32>} : memref<32x32xf32, #tpu.memory_space<vmem>>, vector<4x32xf32>,
    %c8_122 = arith.constant 8 : index
    %c0_123 = arith.constant 0 : index
    %229 = vector.load %arg9[%c8_122, %c0_123] : memref<32x32xf32, #tpu.memory_space<vmem>>, vector<4x32xf32>
    tpu.vector_store %arg9[%c8_122, %c0_123], %227 {strides = array<i32>} : memref<32x32xf32, #tpu.memory_space<vmem>>, vector<4x32xf32>,
    %c6_124 = arith.constant 6 : index
    %c0_125 = arith.constant 0 : index
    %c0_126 = arith.constant 0 : index
    %230 = vector.load %arg0[%c6_124, %c0_125, %c0_126] : memref<8x4x32xf32, #tpu.memory_space<vmem>>, vector<1x4x32xf32>
    %231 = vector.shape_cast %230 : vector<1x4x32xf32> to vector<4x32xf32>
    %c0_127 = arith.constant 0 : index
    %c0_128 = arith.constant 0 : index
    %232 = vector.load %arg7[%c0_127, %c0_128] : memref<8x64xf32, #tpu.memory_space<vmem>>, vector<4x32xf32>
    tpu.vector_store %arg7[%c0_127, %c0_128], %231 {strides = array<i32>} : memref<8x64xf32, #tpu.memory_space<vmem>>, vector<4x32xf32>,
    %c1_129 = arith.constant 1 : index
    %c0_130 = arith.constant 0 : index
    %c0_131 = arith.constant 0 : index
    %233 = vector.load %arg0[%c1_129, %c0_130, %c0_131] : memref<8x4x32xf32, #tpu.memory_space<vmem>>, vector<1x4x32xf32>
    %234 = vector.shape_cast %233 : vector<1x4x32xf32> to vector<4x32xf32>
    %c4_132 = arith.constant 4 : index
    %c0_133 = arith.constant 0 : index
    %235 = vector.load %arg7[%c4_132, %c0_133] : memref<8x64xf32, #tpu.memory_space<vmem>>, vector<4x32xf32>
    tpu.vector_store %arg7[%c4_132, %c0_133], %234 {strides = array<i32>} : memref<8x64xf32, #tpu.memory_space<vmem>>, vector<4x32xf32>,
    %c0_134 = arith.constant 0 : index
    %c32_135 = arith.constant 32 : index
    %236 = vector.load %arg7[%c0_134, %c32_135] : memref<8x64xf32, #tpu.memory_space<vmem>>, vector<4x32xf32>
    tpu.vector_store %arg7[%c0_134, %c32_135], %222 {strides = array<i32>} : memref<8x64xf32, #tpu.memory_space<vmem>>, vector<4x32xf32>,
    %c4_136 = arith.constant 4 : index
    %c32_137 = arith.constant 32 : index
    %237 = vector.load %arg7[%c4_136, %c32_137] : memref<8x64xf32, #tpu.memory_space<vmem>>, vector<4x32xf32>
    tpu.vector_store %arg7[%c4_136, %c32_137], %227 {strides = array<i32>} : memref<8x64xf32, #tpu.memory_space<vmem>>, vector<4x32xf32>,
    %c0_138 = arith.constant 0 : index
    %c0_139 = arith.constant 0 : index
    %238 = vector.load %arg7[%c0_138, %c0_139] : memref<8x64xf32, #tpu.memory_space<vmem>>, vector<8x64xf32>
    %cst_140 = arith.constant dense<0.000000e+00> : vector<8x256xf32>
    %239 = tpu.matmul %238, %0, %cst_140 {dimension_numbers = #tpu.dot_dimension_numbers<[1], [0], [0], [1], [0, 0, 1, 1], [], []>} : vector<8x64xf32>, vector<64x256xf32>, vector<8x256xf32> -> vector<8x256xf32>
    %240 = arith.addf %239, %3 : vector<8x256xf32>
    %241 = arith.negf %240 : vector<8x256xf32>
    %242 = math.exp %241 : vector<8x256xf32>
    %cst_141 = arith.constant 1.000000e+00 : f32
    %243 = vector.broadcast %cst_141 : f32 to vector<8x256xf32>
    %244 = arith.addf %243, %242 : vector<8x256xf32>
    %245 = arith.divf %243, %244 : vector<8x256xf32>
    %246 = math.tanh %240 : vector<8x256xf32>
    %247 = vector.extract_strided_slice %245 {offsets = [0, 0], sizes = [4, 32], strides = [1, 1]} : vector<8x256xf32> to vector<4x32xf32>
    %248 = vector.extract_strided_slice %245 {offsets = [0, 32], sizes = [4, 32], strides = [1, 1]} : vector<8x256xf32> to vector<4x32xf32>
    %249 = vector.extract_strided_slice %246 {offsets = [0, 64], sizes = [4, 32], strides = [1, 1]} : vector<8x256xf32> to vector<4x32xf32>
    %250 = vector.extract_strided_slice %245 {offsets = [0, 96], sizes = [4, 32], strides = [1, 1]} : vector<8x256xf32> to vector<4x32xf32>
    %251 = vector.extract_strided_slice %245 {offsets = [4, 128], sizes = [4, 32], strides = [1, 1]} : vector<8x256xf32> to vector<4x32xf32>
    %252 = vector.extract_strided_slice %245 {offsets = [4, 160], sizes = [4, 32], strides = [1, 1]} : vector<8x256xf32> to vector<4x32xf32>
    %253 = vector.extract_strided_slice %246 {offsets = [4, 192], sizes = [4, 32], strides = [1, 1]} : vector<8x256xf32> to vector<4x32xf32>
    %254 = vector.extract_strided_slice %245 {offsets = [4, 224], sizes = [4, 32], strides = [1, 1]} : vector<8x256xf32> to vector<4x32xf32>
    %255 = arith.mulf %248, %220 : vector<4x32xf32>
    %256 = arith.mulf %247, %249 : vector<4x32xf32>
    %257 = arith.addf %255, %256 : vector<4x32xf32>
    %258 = math.tanh %257 : vector<4x32xf32>
    %259 = arith.mulf %250, %258 : vector<4x32xf32>
    %260 = arith.mulf %252, %225 : vector<4x32xf32>
    %261 = arith.mulf %251, %253 : vector<4x32xf32>
    %262 = arith.addf %260, %261 : vector<4x32xf32>
    %263 = math.tanh %262 : vector<4x32xf32>
    %264 = arith.mulf %254, %263 : vector<4x32xf32>
    %c24_142 = arith.constant 24 : index
    %c0_143 = arith.constant 0 : index
    %265 = vector.load %arg8[%c24_142, %c0_143] : memref<32x32xf32, #tpu.memory_space<vmem>>, vector<4x32xf32>
    tpu.vector_store %arg8[%c24_142, %c0_143], %259 {strides = array<i32>} : memref<32x32xf32, #tpu.memory_space<vmem>>, vector<4x32xf32>,
    %c4_144 = arith.constant 4 : index
    %c0_145 = arith.constant 0 : index
    %266 = vector.load %arg9[%c4_144, %c0_145] : memref<32x32xf32, #tpu.memory_space<vmem>>, vector<4x32xf32>
    tpu.vector_store %arg9[%c4_144, %c0_145], %264 {strides = array<i32>} : memref<32x32xf32, #tpu.memory_space<vmem>>, vector<4x32xf32>,
    %c7_146 = arith.constant 7 : index
    %c0_147 = arith.constant 0 : index
    %c0_148 = arith.constant 0 : index
    %267 = vector.load %arg0[%c7_146, %c0_147, %c0_148] : memref<8x4x32xf32, #tpu.memory_space<vmem>>, vector<1x4x32xf32>
    %268 = vector.shape_cast %267 : vector<1x4x32xf32> to vector<4x32xf32>
    %c0_149 = arith.constant 0 : index
    %c0_150 = arith.constant 0 : index
    %269 = vector.load %arg7[%c0_149, %c0_150] : memref<8x64xf32, #tpu.memory_space<vmem>>, vector<4x32xf32>
    tpu.vector_store %arg7[%c0_149, %c0_150], %268 {strides = array<i32>} : memref<8x64xf32, #tpu.memory_space<vmem>>, vector<4x32xf32>,
    %c0_151 = arith.constant 0 : index
    %c0_152 = arith.constant 0 : index
    %c0_153 = arith.constant 0 : index
    %270 = vector.load %arg0[%c0_151, %c0_152, %c0_153] : memref<8x4x32xf32, #tpu.memory_space<vmem>>, vector<1x4x32xf32>
    %271 = vector.shape_cast %270 : vector<1x4x32xf32> to vector<4x32xf32>
    %c4_154 = arith.constant 4 : index
    %c0_155 = arith.constant 0 : index
    %272 = vector.load %arg7[%c4_154, %c0_155] : memref<8x64xf32, #tpu.memory_space<vmem>>, vector<4x32xf32>
    tpu.vector_store %arg7[%c4_154, %c0_155], %271 {strides = array<i32>} : memref<8x64xf32, #tpu.memory_space<vmem>>, vector<4x32xf32>,
    %c0_156 = arith.constant 0 : index
    %c32_157 = arith.constant 32 : index
    %273 = vector.load %arg7[%c0_156, %c32_157] : memref<8x64xf32, #tpu.memory_space<vmem>>, vector<4x32xf32>
    tpu.vector_store %arg7[%c0_156, %c32_157], %259 {strides = array<i32>} : memref<8x64xf32, #tpu.memory_space<vmem>>, vector<4x32xf32>,
    %c4_158 = arith.constant 4 : index
    %c32_159 = arith.constant 32 : index
    %274 = vector.load %arg7[%c4_158, %c32_159] : memref<8x64xf32, #tpu.memory_space<vmem>>, vector<4x32xf32>
    tpu.vector_store %arg7[%c4_158, %c32_159], %264 {strides = array<i32>} : memref<8x64xf32, #tpu.memory_space<vmem>>, vector<4x32xf32>,
    %c0_160 = arith.constant 0 : index
    %c0_161 = arith.constant 0 : index
    %275 = vector.load %arg7[%c0_160, %c0_161] : memref<8x64xf32, #tpu.memory_space<vmem>>, vector<8x64xf32>
    %cst_162 = arith.constant dense<0.000000e+00> : vector<8x256xf32>
    %276 = tpu.matmul %275, %0, %cst_162 {dimension_numbers = #tpu.dot_dimension_numbers<[1], [0], [0], [1], [0, 0, 1, 1], [], []>} : vector<8x64xf32>, vector<64x256xf32>, vector<8x256xf32> -> vector<8x256xf32>
    %277 = arith.addf %276, %3 : vector<8x256xf32>
    %278 = arith.negf %277 : vector<8x256xf32>
    %279 = math.exp %278 : vector<8x256xf32>
    %cst_163 = arith.constant 1.000000e+00 : f32
    %280 = vector.broadcast %cst_163 : f32 to vector<8x256xf32>
    %281 = arith.addf %280, %279 : vector<8x256xf32>
    %282 = arith.divf %280, %281 : vector<8x256xf32>
    %283 = math.tanh %277 : vector<8x256xf32>
    %284 = vector.extract_strided_slice %282 {offsets = [0, 0], sizes = [4, 32], strides = [1, 1]} : vector<8x256xf32> to vector<4x32xf32>
    %285 = vector.extract_strided_slice %282 {offsets = [0, 32], sizes = [4, 32], strides = [1, 1]} : vector<8x256xf32> to vector<4x32xf32>
    %286 = vector.extract_strided_slice %283 {offsets = [0, 64], sizes = [4, 32], strides = [1, 1]} : vector<8x256xf32> to vector<4x32xf32>
    %287 = vector.extract_strided_slice %282 {offsets = [0, 96], sizes = [4, 32], strides = [1, 1]} : vector<8x256xf32> to vector<4x32xf32>
    %288 = vector.extract_strided_slice %282 {offsets = [4, 128], sizes = [4, 32], strides = [1, 1]} : vector<8x256xf32> to vector<4x32xf32>
    %289 = vector.extract_strided_slice %282 {offsets = [4, 160], sizes = [4, 32], strides = [1, 1]} : vector<8x256xf32> to vector<4x32xf32>
    %290 = vector.extract_strided_slice %283 {offsets = [4, 192], sizes = [4, 32], strides = [1, 1]} : vector<8x256xf32> to vector<4x32xf32>
    %291 = vector.extract_strided_slice %282 {offsets = [4, 224], sizes = [4, 32], strides = [1, 1]} : vector<8x256xf32> to vector<4x32xf32>
    %292 = arith.mulf %285, %257 : vector<4x32xf32>
    %293 = arith.mulf %284, %286 : vector<4x32xf32>
    %294 = arith.addf %292, %293 : vector<4x32xf32>
    %295 = math.tanh %294 : vector<4x32xf32>
    %296 = arith.mulf %287, %295 : vector<4x32xf32>
    %297 = arith.mulf %289, %262 : vector<4x32xf32>
    %298 = arith.mulf %288, %290 : vector<4x32xf32>
    %299 = arith.addf %297, %298 : vector<4x32xf32>
    %300 = math.tanh %299 : vector<4x32xf32>
    %301 = arith.mulf %291, %300 : vector<4x32xf32>
    %c28_164 = arith.constant 28 : index
    %c0_165 = arith.constant 0 : index
    %302 = vector.load %arg8[%c28_164, %c0_165] : memref<32x32xf32, #tpu.memory_space<vmem>>, vector<4x32xf32>
    tpu.vector_store %arg8[%c28_164, %c0_165], %296 {strides = array<i32>} : memref<32x32xf32, #tpu.memory_space<vmem>>, vector<4x32xf32>,
    %c0_166 = arith.constant 0 : index
    %c0_167 = arith.constant 0 : index
    %303 = vector.load %arg9[%c0_166, %c0_167] : memref<32x32xf32, #tpu.memory_space<vmem>>, vector<4x32xf32>
    tpu.vector_store %arg9[%c0_166, %c0_167], %301 {strides = array<i32>} : memref<32x32xf32, #tpu.memory_space<vmem>>, vector<4x32xf32>,
    %c0_168 = arith.constant 0 : index
    %c0_169 = arith.constant 0 : index
    %304 = vector.load %arg8[%c0_168, %c0_169] : memref<32x32xf32, #tpu.memory_space<vmem>>, vector<32x32xf32>
    %c0_170 = arith.constant 0 : index
    %c0_171 = arith.constant 0 : index
    %305 = vector.load %arg9[%c0_170, %c0_171] : memref<32x32xf32, #tpu.memory_space<vmem>>, vector<32x32xf32>
    %c0_172 = arith.constant 0 : index
    %c0_173 = arith.constant 0 : index
    %306 = vector.load %arg3[%c0_172, %c0_173] : memref<32x128xf32, #tpu.memory_space<vmem>>, vector<32x128xf32>
    %cst_174 = arith.constant dense<0.000000e+00> : vector<32x128xf32>
    %307 = tpu.matmul %304, %306, %cst_174 {dimension_numbers = #tpu.dot_dimension_numbers<[1], [0], [0], [1], [0, 0, 1, 1], [], []>} : vector<32x32xf32>, vector<32x128xf32>, vector<32x128xf32> -> vector<32x128xf32>
    %c0_175 = arith.constant 0 : index
    %c0_176 = arith.constant 0 : index
    %308 = vector.load %arg4[%c0_175, %c0_176] : memref<32x128xf32, #tpu.memory_space<vmem>>, vector<32x128xf32>
    %cst_177 = arith.constant dense<0.000000e+00> : vector<32x128xf32>
    %309 = tpu.matmul %305, %308, %cst_177 {dimension_numbers = #tpu.dot_dimension_numbers<[1], [0], [0], [1], [0, 0, 1, 1], [], []>} : vector<32x32xf32>, vector<32x128xf32>, vector<32x128xf32> -> vector<32x128xf32>
    %310 = arith.addf %307, %309 : vector<32x128xf32>
    %c0_178 = arith.constant 0 : index
    %c0_179 = arith.constant 0 : index
    %311 = vector.load %arg5[%c0_178, %c0_179] : memref<1x128xf32, #tpu.memory_space<vmem>>, vector<1x128xf32>
    %312 = vector.broadcast %311 : vector<1x128xf32> to vector<32x128xf32>
    %313 = arith.addf %310, %312 : vector<32x128xf32>
    %c0_180 = arith.constant 0 : index
    %c0_181 = arith.constant 0 : index
    %314 = vector.load %arg6[%c0_180, %c0_181] : memref<32x128xf32, #tpu.memory_space<vmem>>, vector<32x128xf32>
    tpu.vector_store %arg6[%c0_180, %c0_181], %313 {strides = array<i32>} : memref<32x128xf32, #tpu.memory_space<vmem>>, vector<32x128xf32>,
    return
  }
}

</mosaic_0001>

<llo_original>
// kernel: tpu_custom_call.1
$region0: #{tpu_custom_call.1}
  #allocation0 [shape = 'u32[]', space=smem, size = 0x4, offset = 0x4, fixed_abs, tag = 'smem constant byte address 0x4 - core index']
  #allocation1 [shape = 'u32[144,128]{1,0:T(1,128)}', space=vmem, size = 0x12000, scoped, tag = 'internal scratch']
  #allocation2 [shape = 'f32[8,64]{1,0:T(8,128)}', space=vmem, size = 0x1000, scoped, tag = 'scratch operand']
  #allocation3 [shape = 'f32[32,32]{1,0:T(8,128)}', space=vmem, size = 0x4000, scoped, tag = 'scratch operand']
  #allocation4 [shape = 'f32[32,32]{1,0:T(8,128)}', space=vmem, size = 0x4000, scoped, tag = 'scratch operand']
  %s0 = inlined_call_operand.hbm [shape: f32[8,4,32], index: 0, kind: input, shape index: {}]
  %s1 = inlined_call_operand.hbm [shape: f32[64,256], index: 1, kind: input, shape index: {}]
  %s2 = inlined_call_operand.vmem [shape: f32[1,256], index: 2, kind: input, shape index: {}]
  %s3 = inlined_call_operand.hbm [shape: f32[32,128], index: 3, kind: input, shape index: {}]
  %s4 = inlined_call_operand.hbm [shape: f32[32,128], index: 4, kind: input, shape index: {}]
  %s5 = inlined_call_operand.vmem [shape: f32[1,128], index: 5, kind: input, shape index: {}]
  %s6 = inlined_call_operand.hbm [shape: f32[32,128], index: 6, kind: output, shape index: {}]
  %s7 = sld [smem:[#allocation0]]
  $region50: #{tpu_custom_call.1} parent=0
    _
  %s9 = ssub.s32 1, %s7
  %s10 = scalar_select 0, %s9, %s7
  $region1: #{tpu_custom_call.1} parent=0
    #allocation5 [shape = 'u8[16384]{0}', space=vmem, size = 0x4000, scoped, tag = 'input window, operand 0, single buffered']
    #allocation6 [shape = 's32[1]{0}', space=sflag, size = 0x4, scoped, tag = 'scoped memory for tpu_custom_call.1']
    #allocation7 [shape = 's32[1]{0}', space=sflag, size = 0x4, scoped, tag = 'scoped memory for tpu_custom_call.1']
    #allocation8 [shape = 'u8[65536]{0}', space=vmem, size = 0x10000, scoped, tag = 'input window, operand 1, single buffered']
    #allocation9 [shape = 's32[1]{0}', space=sflag, size = 0x4, scoped, tag = 'scoped memory for tpu_custom_call.1']
    #allocation10 [shape = 'u8[16384]{0}', space=vmem, size = 0x4000, scoped, tag = 'input window, operand 3, single buffered']
    #allocation11 [shape = 'u8[16384]{0}', space=vmem, size = 0x4000, scoped, tag = 'input window, operand 4, single buffered']
    #allocation12 [shape = 's32[1]{0}', space=sflag, size = 0x4, scoped, tag = 'scoped memory for tpu_custom_call.1']
    #allocation13 [shape = 'u8[16384]{0}', space=vmem, size = 0x4000, scoped, tag = 'output window, operand 0, single buffered']
    %11 = vsyncpa [#allocation6], 0
    %12 = vsyncpa [#allocation9], 0
    %13 = vsyncpa [#allocation12], 0
    %14 = vsyncpa [#allocation7], 0
    // Predicated region
    $region2: #{tpu_custom_call.1} parent=1 // pred_check
      _
    $region3: #{tpu_custom_call.1} parent=1 // pred_check_branch
      %16 = sbr.rel (0) target = $region5
    $region4: #{tpu_custom_call.1} parent=1 // pred_region
      %s18 = ssub.s32 512, 512
      %19 = vsyncadd [#allocation6], %s18
      %s20 = sshll.u32 [#allocation5], 4
      %s21 = int_to_ptr.vmem [resolvable:$true] %s20
      %26 = dma.hbm_to_vmem [thread:$0]  %s0, 512, %s21, [#allocation6], 64, 64, 4
    $region5: #{tpu_custom_call.1} parent=1 // pred_fallthru
      _
    // Predicated region
    $region6: #{tpu_custom_call.1} parent=1 // pred_check
      _
    $region7: #{tpu_custom_call.1} parent=1 // pred_check_branch
      %28 = sbr.rel (0) target = $region9
    $region8: #{tpu_custom_call.1} parent=1 // pred_region
      %s30 = ssub.s32 2048, 2048
      %31 = vsyncadd [#allocation9], %s30
      %s32 = sshll.u32 [#allocation8], 4
      %s33 = int_to_ptr.vmem [resolvable:$true] %s32
      %38 = dma.hbm_to_vmem [thread:$0]  %s1, 2048, %s33, [#allocation9], 256, 256, 16
    $region9: #{tpu_custom_call.1} parent=1 // pred_fallthru
      _
    // Predicated region
    $region10: #{tpu_custom_call.1} parent=1 // pred_check
      _
    $region11: #{tpu_custom_call.1} parent=1 // pred_check_branch
      %40 = sbr.rel (0) target = $region13
    $region12: #{tpu_custom_call.1} parent=1 // pred_region
      _
    $region13: #{tpu_custom_call.1} parent=1 // pred_fallthru
      _
    // Predicated region
    $region14: #{tpu_custom_call.1} parent=1 // pred_check
      _
    $region15: #{tpu_custom_call.1} parent=1 // pred_check_branch
      %42 = sbr.rel (0) target = $region17
    $region16: #{tpu_custom_call.1} parent=1 // pred_region
      %s44 = ssub.s32 512, 512
      %45 = vsyncadd [#allocation9], %s44
      %s46 = sshll.u32 [#allocation10], 4
      %s47 = int_to_ptr.vmem [resolvable:$true] %s46
      %52 = dma.hbm_to_vmem [thread:$0]  %s3, 512, %s47, [#allocation9], 128, 128, 8
    $region17: #{tpu_custom_call.1} parent=1 // pred_fallthru
      _
    // Predicated region
    $region18: #{tpu_custom_call.1} parent=1 // pred_check
      _
    $region19: #{tpu_custom_call.1} parent=1 // pred_check_branch
      %54 = sbr.rel (0) target = $region21
    $region20: #{tpu_custom_call.1} parent=1 // pred_region
      %s56 = ssub.s32 512, 512
      %57 = vsyncadd [#allocation12], %s56
      %s58 = sshll.u32 [#allocation11], 4
      %s59 = int_to_ptr.vmem [resolvable:$true] %s58
      %64 = dma.hbm_to_vmem [thread:$0]  %s4, 512, %s59, [#allocation12], 128, 128, 8
    $region21: #{tpu_custom_call.1} parent=1 // pred_fallthru
      _
    // Predicated region
    $region22: #{tpu_custom_call.1} parent=1 // pred_check
      _
    $region23: #{tpu_custom_call.1} parent=1 // pred_check_branch
      %66 = sbr.rel (0) target = $region25
    $region24: #{tpu_custom_call.1} parent=1 // pred_region
      _
    $region25: #{tpu_custom_call.1} parent=1 // pred_fallthru
      _
    // Predicated region
    $region26: #{tpu_custom_call.1} parent=1 // pred_check
      _
    $region27: #{tpu_custom_call.1} parent=1 // pred_check_branch
      %68 = sbr.rel (0) target = $region29
    $region28: #{tpu_custom_call.1} parent=1 // pred_region
      %69 = dma.done [#allocation6], 512
    $region29: #{tpu_custom_call.1} parent=1 // pred_fallthru
      _
    // Predicated region
    $region30: #{tpu_custom_call.1} parent=1 // pred_check
      _
    $region31: #{tpu_custom_call.1} parent=1 // pred_check_branch
      %71 = sbr.rel (0) target = $region33
    $region32: #{tpu_custom_call.1} parent=1 // pred_region
      %72 = dma.done [#allocation9], 2048
    $region33: #{tpu_custom_call.1} parent=1 // pred_fallthru
      _
    // Predicated region
    $region34: #{tpu_custom_call.1} parent=1 // pred_check
      _
    $region35: #{tpu_custom_call.1} parent=1 // pred_check_branch
      %74 = sbr.rel (0) target = $region37
    $region36: #{tpu_custom_call.1} parent=1 // pred_region
      %75 = dma.done [#allocation9], 512
    $region37: #{tpu_custom_call.1} parent=1 // pred_fallthru
      _
    // Predicated region
    $region38: #{tpu_custom_call.1} parent=1 // pred_check
      _
    $region39: #{tpu_custom_call.1} parent=1 // pred_check_branch
      %77 = sbr.rel (0) target = $region41
    $region40: #{tpu_custom_call.1} parent=1 // pred_region
      %78 = dma.done [#allocation12], 512
    $region41: #{tpu_custom_call.1} parent=1 // pred_fallthru
      _
    %v79 = vld [vmem:[#allocation8] sm:$0xff]
    %v80 = vld [vmem:[#allocation8 + $0x8] sm:$0xff]
    %v81 = vld [vmem:[#allocation8 + $0x10] sm:$0xff]
    %v82 = vld [vmem:[#allocation8 + $0x18] sm:$0xff]
    %v83 = vld [vmem:[#allocation8 + $0x20] sm:$0xff]
    %v84 = vld [vmem:[#allocation8 + $0x28] sm:$0xff]
    %v85 = vld [vmem:[#allocation8 + $0x30] sm:$0xff]
    %v86 = vld [vmem:[#allocation8 + $0x38] sm:$0xff]
    %v87 = vld [vmem:[#allocation8 + $0x40] sm:$0xff]
    %v88 = vld [vmem:[#allocation8 + $0x48] sm:$0xff]
    %v89 = vld [vmem:[#allocation8 + $0x50] sm:$0xff]
    %v90 = vld [vmem:[#allocation8 + $0x58] sm:$0xff]
    %v91 = vld [vmem:[#allocation8 + $0x60] sm:$0xff]
    %v92 = vld [vmem:[#allocation8 + $0x68] sm:$0xff]
    %v93 = vld [vmem:[#allocation8 + $0x70] sm:$0xff]
    %v94 = vld [vmem:[#allocation8 + $0x78] sm:$0xff]
    %v95 = vld [vmem:[%s2] sm:$0x3]
    %v97 = vlaneseq
    %v98 = vshrl.u32 %v97, 7
    %v99 = vsub.s32 0, %v98
    %v100 = vrot.slane %v95, %v99
    %v101 = vlaneseq
    %v102 = vshrl.u32 %v101, 7
    %v103 = vsub.s32 1, %v102
    %v104 = vrot.slane %v95, %v103
    %v107 = vld [vmem:[#allocation5] sm:$0xf]
    %vm108 = vcmask 257024
    %109 = vst.msk [vmem:[#allocation2] sm:$0xf] %vm108, %v107
    %s110 = scalar_lea.vmem [#allocation5], 28
    %v111 = vld [vmem:[%s110] sm:$0xf]
    %112 = vst.msk [vmem:[#allocation2 + $0x4] sm:$0xf] %vm108, %v111
    %vm113 = vcmask 519424
    %114 = vst.msk [vmem:[#allocation2] sm:$0xf] %vm113, 0.0
    %115 = vst.msk [vmem:[#allocation2 + $0x4] sm:$0xf] %vm113, 0.0
    %v116 = vld [vmem:[#allocation2] sm:$0xff]
    %vm117 = vcmask 523264
    %v119 = vsel %vm117, %v116, 0
    %121 = vmatprep.subr.mxu0 %v80
    %122 = vmatpush1.msra.mxu0 %v79
    %123 = vmatprep.subr.mxu0 %v82
    %124 = vmatpush1.msra.mxu0 %v81
    %125 = vmatprep.subr.mxu0 %v84
    %126 = vmatpush1.msra.mxu0 %v83
    %127 = vmatprep.subr.mxu0 %v86
    %128 = vmatpush1.msra.mxu0 %v85
    %129 = vmatprep.subr.mxu0 %v88
    %130 = vmatpush1.msra.mxu0 %v87
    %131 = vmatprep.subr.mxu0 %v90
    %132 = vmatpush1.msra.mxu0 %v89
    %133 = vmatprep.subr.mxu0 %v92
    %134 = vmatpush1.msra.mxu0 %v91
    %135 = vmatprep.subr.mxu0 %v94
    %136 = vmatpush1.msra.mxu0 %v93
    %137 = vmatprep.subr.mxu0 0.0
    %138 = vmatpush1.msra.mxu0 0.0
    %139 = vmatprep.subr.mxu0 0.0
    %140 = vmatpush1.msra.mxu0 0.0
    %141 = vmatprep.subr.mxu0 0.0
    %142 = vmatpush1.msra.mxu0 0.0
    %143 = vmatprep.subr.mxu0 0.0
    %144 = vmatpush1.msra.mxu0 0.0
    %145 = vmatprep.subr.mxu0 0.0
    %146 = vmatpush1.msra.mxu0 0.0
    %147 = vmatprep.subr.mxu0 0.0
    %148 = vmatpush1.msra.mxu0 0.0
    %149 = vmatprep.subr.mxu0 0.0
    %150 = vmatpush1.msra.mxu0 0.0
    %151 = vmatprep.subr.mxu0 0.0
    %152 = vmatpush1.msra.mxu0 0.0
    %153 = vmatprep.subr.mxu0 0.0
    %154 = vmatpush1.msra.mxu0 0.0
    %155 = vmatprep.subr.mxu0 0.0
    %156 = vmatpush1.msra.mxu0 0.0
    %157 = vmatprep.subr.mxu0 0.0
    %158 = vmatpush1.msra.mxu0 0.0
    %159 = vmatprep.subr.mxu0 0.0
    %160 = vmatpush1.msra.mxu0 0.0
    %161 = vmatprep.subr.mxu0 0.0
    %162 = vmatpush1.msra.mxu0 0.0
    %163 = vmatprep.subr.mxu0 0.0
    %164 = vmatpush1.msra.mxu0 0.0
    %165 = vmatprep.subr.mxu0 0.0
    %166 = vmatpush1.msra.mxu0 0.0
    %167 = vmatprep.subr.mxu0 0.0
    %168 = vmatpush1.msra.mxu0 0.0
    %169 = vmatprep.subr.mxu0 0.0
    %170 = vmatpush1.msra.mxu0 0.0
    %171 = vmatprep.subr.mxu0 0.0
    %172 = vmatpush1.msra.mxu0 0.0
    %173 = vmatprep.subr.mxu0 0.0
    %174 = vmatpush1.msra.mxu0 0.0
    %175 = vmatprep.subr.mxu0 0.0
    %176 = vmatpush1.msra.mxu0 0.0
    %177 = vmatprep.subr.mxu0 0.0
    %178 = vmatpush1.msra.mxu0 0.0
    %179 = vmatprep.subr.mxu0 0.0
    %180 = vmatpush1.msra.mxu0 0.0
    %181 = vmatprep.subr.mxu0 0.0
    %182 = vmatpush1.msra.mxu0 0.0
    %183 = vmatprep.subr.mxu0 0.0
    %184 = vmatpush1.msra.mxu0 0.0
    %185 = vmatprep.mubr.f32.mxu0 0.0
    %186 = vmatmul.mubr.f32.gmra.mrb[0].mxu0 %v119
    %v187 = vpop.f32.mrb[0].mxu0
    %v188 = vadd.f32 %v100, %v187
    %v189 = vpop.f32.mrb[0].mxu0
    %v190 = vadd.f32 %v104, %v189
    %191 = vdwg.mxu0
    %v192 = vxor.u32 %v188, 2147483648
    %v193 = vxor.u32 %v190, 2147483648
    %v194 = vmul.f32 %v192, 1.442695
    %v195 = vpow.pop %v194
    %v196 = vmul.f32 %v193, 1.442695
    %v197 = vpow.pop %v196
    %v198 = vadd.f32 %v195, 1.0
    %v199 = vadd.f32 %v197, 1.0
    %v200 = vrcp.pop %v198
    %v201 = vmul.f32 1.0, %v200
    %v202 = vrcp.pop %v199
    %v203 = vmul.f32 1.0, %v202
    %v204 = vtanh.pop %v188
    %v205 = vtanh.pop %v190
    %v206 = vmul.f32 %v201, 0.0
    %208 = vrot.lane.b32.xlu0 %v204, 64
    %v209 = vpop.permute.xlu0 %208
    %v211 = vmul.f32 %v201, %v209
    %213 = vrot.lane.b32.xlu0 %v211, 32
    %v214 = vpop.permute.xlu0 %213
    %v216 = vadd.f32 %v206, %v214
    %v217 = vtanh.pop %v216
    %219 = vrot.lane.b32.xlu0 %v217, 64
    %v220 = vpop.permute.xlu0 %219
    %v222 = vmul.f32 %v201, %v220
    %v223 = vmul.f32 %v203, 0.0
    %225 = vrot.lane.b32.xlu0 %v205, 64
    %v226 = vpop.permute.xlu0 %225
    %v228 = vmul.f32 %v203, %v226
    %230 = vrot.lane.b32.xlu0 %v228, 32
    %v231 = vpop.permute.xlu0 %230
    %v233 = vadd.f32 %v223, %v231
    %v234 = vtanh.pop %v233
    %236 = vrot.lane.b32.xlu0 %v234, 64
    %v237 = vpop.permute.xlu0 %236
    %v239 = vmul.f32 %v203, %v237
    %241 = vrot.lane.b32.xlu0 %v222, 32
    %v242 = vpop.permute.xlu0 %241
    %244 = vst.msk [vmem:[#allocation3] sm:$0xf] %vm108, %v242
    %246 = vrot.lane.b32.xlu0 %v239, 32
    %v247 = vpop.permute.xlu0 %246
    %vm249 = vcmask 261124
    %250 = vst.msk [vmem:[#allocation4 + $0x18] sm:$0xf0] %vm249, %v247
    %s251 = scalar_lea.vmem [#allocation5], 4
    %v252 = vld [vmem:[%s251] sm:$0xf]
    %253 = vst.msk [vmem:[#allocation2] sm:$0xf] %vm108, %v252
    %s254 = scalar_lea.vmem [#allocation5], 24
    %v255 = vld [vmem:[%s254] sm:$0xf]
    %256 = vst.msk [vmem:[#allocation2 + $0x4] sm:$0xf] %vm108, %v255
    %257 = vrot.lane.b32.xlu0 %v222, 64
    %v258 = vpop.permute.xlu0 %257
    %260 = vst.msk [vmem:[#allocation2] sm:$0xf] %vm113, %v258
    %261 = vrot.lane.b32.xlu0 %v239, 64
    %v262 = vpop.permute.xlu0 %261
    %vm264 = vcmask 523524
    %265 = vst.msk [vmem:[#allocation2] sm:$0xf0] %vm264, %v262
    %v266 = vld [vmem:[#allocation2] sm:$0xff]
    %v268 = vsel %vm117, %v266, 0
    %270 = vmatprep.subr.mxu0 %v80
    %271 = vmatpush1.msra.mxu0 %v79
    %272 = vmatprep.subr.mxu0 %v82
    %273 = vmatpush1.msra.mxu0 %v81
    %274 = vmatprep.subr.mxu0 %v84
    %275 = vmatpush1.msra.mxu0 %v83
    %276 = vmatprep.subr.mxu0 %v86
    %277 = vmatpush1.msra.mxu0 %v85
    %278 = vmatprep.subr.mxu0 %v88
    %279 = vmatpush1.msra.mxu0 %v87
    %280 = vmatprep.subr.mxu0 %v90
    %281 = vmatpush1.msra.mxu0 %v89
    %282 = vmatprep.subr.mxu0 %v92
    %283 = vmatpush1.msra.mxu0 %v91
    %284 = vmatprep.subr.mxu0 %v94
    %285 = vmatpush1.msra.mxu0 %v93
    %286 = vmatprep.subr.mxu0 0.0
    %287 = vmatpush1.msra.mxu0 0.0
    %288 = vmatprep.subr.mxu0 0.0
    %289 = vmatpush1.msra.mxu0 0.0
    %290 = vmatprep.subr.mxu0 0.0
    %291 = vmatpush1.msra.mxu0 0.0
    %292 = vmatprep.subr.mxu0 0.0
    %293 = vmatpush1.msra.mxu0 0.0
    %294 = vmatprep.subr.mxu0 0.0
    %295 = vmatpush1.msra.mxu0 0.0
    %296 = vmatprep.subr.mxu0 0.0
    %297 = vmatpush1.msra.mxu0 0.0
    %298 = vmatprep.subr.mxu0 0.0
    %299 = vmatpush1.msra.mxu0 0.0
    %300 = vmatprep.subr.mxu0 0.0
    %301 = vmatpush1.msra.mxu0 0.0
    %302 = vmatprep.subr.mxu0 0.0
    %303 = vmatpush1.msra.mxu0 0.0
    %304 = vmatprep.subr.mxu0 0.0
    %305 = vmatpush1.msra.mxu0 0.0
    %306 = vmatprep.subr.mxu0 0.0
    %307 = vmatpush1.msra.mxu0 0.0
    %308 = vmatprep.subr.mxu0 0.0
    %309 = vmatpush1.msra.mxu0 0.0
    %310 = vmatprep.subr.mxu0 0.0
    %311 = vmatpush1.msra.mxu0 0.0
    %312 = vmatprep.subr.mxu0 0.0
    %313 = vmatpush1.msra.mxu0 0.0
    %314 = vmatprep.subr.mxu0 0.0
    %315 = vmatpush1.msra.mxu0 0.0
    %316 = vmatprep.subr.mxu0 0.0
    %317 = vmatpush1.msra.mxu0 0.0
    %318 = vmatprep.subr.mxu0 0.0
    %319 = vmatpush1.msra.mxu0 0.0
    %320 = vmatprep.subr.mxu0 0.0
    %321 = vmatpush1.msra.mxu0 0.0
    %322 = vmatprep.subr.mxu0 0.0
    %323 = vmatpush1.msra.mxu0 0.0
    %324 = vmatprep.subr.mxu0 0.0
    %325 = vmatpush1.msra.mxu0 0.0
    %326 = vmatprep.subr.mxu0 0.0
    %327 = vmatpush1.msra.mxu0 0.0
    %328 = vmatprep.subr.mxu0 0.0
    %329 = vmatpush1.msra.mxu0 0.0
    %330 = vmatprep.subr.mxu0 0.0
    %331 = vmatpush1.msra.mxu0 0.0
    %332 = vmatprep.subr.mxu0 0.0
    %333 = vmatpush1.msra.mxu0 0.0
    %334 = vmatprep.mubr.f32.mxu0 0.0
    %335 = vmatmul.mubr.f32.gmra.mrb[0].mxu0 %v268
    %v336 = vpop.f32.mrb[0].mxu0
    %v337 = vadd.f32 %v100, %v336
    %v338 = vpop.f32.mrb[0].mxu0
    %v339 = vadd.f32 %v104, %v338
    %340 = vdwg.mxu0
    %v341 = vxor.u32 %v337, 2147483648
    %v342 = vxor.u32 %v339, 2147483648
    %v343 = vmul.f32 %v341, 1.442695
    %v344 = vpow.pop %v343
    %v345 = vmul.f32 %v342, 1.442695
    %v346 = vpow.pop %v345
    %v347 = vadd.f32 %v344, 1.0
    %v348 = vadd.f32 %v346, 1.0
    %v349 = vrcp.pop %v347
    %v350 = vmul.f32 1.0, %v349
    %v351 = vrcp.pop %v348
    %v352 = vmul.f32 1.0, %v351
    %v353 = vtanh.pop %v337
    %v354 = vtanh.pop %v339
    %v355 = vmul.f32 %v350, %v216
    %357 = vrot.lane.b32.xlu0 %v353, 64
    %v358 = vpop.permute.xlu0 %357
    %v360 = vmul.f32 %v350, %v358
    %362 = vrot.lane.b32.xlu0 %v360, 32
    %v363 = vpop.permute.xlu0 %362
    %v365 = vadd.f32 %v355, %v363
    %v366 = vtanh.pop %v365
    %368 = vrot.lane.b32.xlu0 %v366, 64
    %v369 = vpop.permute.xlu0 %368
    %v371 = vmul.f32 %v350, %v369
    %v372 = vmul.f32 %v352, %v233
    %374 = vrot.lane.b32.xlu0 %v354, 64
    %v375 = vpop.permute.xlu0 %374
    %v377 = vmul.f32 %v352, %v375
    %379 = vrot.lane.b32.xlu0 %v377, 32
    %v380 = vpop.permute.xlu0 %379
    %v382 = vadd.f32 %v372, %v380
    %v383 = vtanh.pop %v382
    %385 = vrot.lane.b32.xlu0 %v383, 64
    %v386 = vpop.permute.xlu0 %385
    %v388 = vmul.f32 %v352, %v386
    %390 = vrot.lane.b32.xlu0 %v371, 32
    %v391 = vpop.permute.xlu0 %390
    %393 = vst.msk [vmem:[#allocation3 + $0x4] sm:$0xf] %vm108, %v391
    %395 = vrot.lane.b32.xlu0 %v388, 32
    %v396 = vpop.permute.xlu0 %395
    %398 = vst.msk [vmem:[#allocation4 + $0x14] sm:$0xf0] %vm249, %v396
    %s399 = scalar_lea.vmem [#allocation5], 8
    %v400 = vld [vmem:[%s399] sm:$0xf]
    %401 = vst.msk [vmem:[#allocation2] sm:$0xf] %vm108, %v400
    %s402 = scalar_lea.vmem [#allocation5], 20
    %v403 = vld [vmem:[%s402] sm:$0xf]
    %404 = vst.msk [vmem:[#allocation2 + $0x4] sm:$0xf] %vm108, %v403
    %405 = vrot.lane.b32.xlu0 %v371, 64
    %v406 = vpop.permute.xlu0 %405
    %408 = vst.msk [vmem:[#allocation2] sm:$0xf] %vm113, %v406
    %409 = vrot.lane.b32.xlu0 %v388, 64
    %v410 = vpop.permute.xlu0 %409
    %412 = vst.msk [vmem:[#allocation2] sm:$0xf0] %vm264, %v410
    %v413 = vld [vmem:[#allocation2] sm:$0xff]
    %v415 = vsel %vm117, %v413, 0
    %417 = vmatprep.subr.mxu0 %v80
    %418 = vmatpush1.msra.mxu0 %v79
    %419 = vmatprep.subr.mxu0 %v82
    %420 = vmatpush1.msra.mxu0 %v81
    %421 = vmatprep.subr.mxu0 %v84
    %422 = vmatpush1.msra.mxu0 %v83
    %423 = vmatprep.subr.mxu0 %v86
    %424 = vmatpush1.msra.mxu0 %v85
    %425 = vmatprep.subr.mxu0 %v88
    %426 = vmatpush1.msra.mxu0 %v87
    %427 = vmatprep.subr.mxu0 %v90
    %428 = vmatpush1.msra.mxu0 %v89
    %429 = vmatprep.subr.mxu0 %v92
    %430 = vmatpush1.msra.mxu0 %v91
    %431 = vmatprep.subr.mxu0 %v94
    %432 = vmatpush1.msra.mxu0 %v93
    %433 = vmatprep.subr.mxu0 0.0
    %434 = vmatpush1.msra.mxu0 0.0
    %435 = vmatprep.subr.mxu0 0.0
    %436 = vmatpush1.msra.mxu0 0.0
    %437 = vmatprep.subr.mxu0 0.0
    %438 = vmatpush1.msra.mxu0 0.0
    %439 = vmatprep.subr.mxu0 0.0
    %440 = vmatpush1.msra.mxu0 0.0
    %441 = vmatprep.subr.mxu0 0.0
    %442 = vmatpush1.msra.mxu0 0.0
    %443 = vmatprep.subr.mxu0 0.0
    %444 = vmatpush1.msra.mxu0 0.0
    %445 = vmatprep.subr.mxu0 0.0
    %446 = vmatpush1.msra.mxu0 0.0
    %447 = vmatprep.subr.mxu0 0.0
    %448 = vmatpush1.msra.mxu0 0.0
    %449 = vmatprep.subr.mxu0 0.0
    %450 = vmatpush1.msra.mxu0 0.0
    %451 = vmatprep.subr.mxu0 0.0
    %452 = vmatpush1.msra.mxu0 0.0
    %453 = vmatprep.subr.mxu0 0.0
    %454 = vmatpush1.msra.mxu0 0.0
    %455 = vmatprep.subr.mxu0 0.0
    %456 = vmatpush1.msra.mxu0 0.0
    %457 = vmatprep.subr.mxu0 0.0
    %458 = vmatpush1.msra.mxu0 0.0
    %459 = vmatprep.subr.mxu0 0.0
    %460 = vmatpush1.msra.mxu0 0.0
    %461 = vmatprep.subr.mxu0 0.0
    %462 = vmatpush1.msra.mxu0 0.0
    %463 = vmatprep.subr.mxu0 0.0
    %464 = vmatpush1.msra.mxu0 0.0
    %465 = vmatprep.subr.mxu0 0.0
    %466 = vmatpush1.msra.mxu0 0.0
    %467 = vmatprep.subr.mxu0 0.0
    %468 = vmatpush1.msra.mxu0 0.0
    %469 = vmatprep.subr.mxu0 0.0
    %470 = vmatpush1.msra.mxu0 0.0
    %471 = vmatprep.subr.mxu0 0.0
    %472 = vmatpush1.msra.mxu0 0.0
    %473 = vmatprep.subr.mxu0 0.0
    %474 = vmatpush1.msra.mxu0 0.0
    %475 = vmatprep.subr.mxu0 0.0
    %476 = vmatpush1.msra.mxu0 0.0
    %477 = vmatprep.subr.mxu0 0.0
    %478 = vmatpush1.msra.mxu0 0.0
    %479 = vmatprep.subr.mxu0 0.0
    %480 = vmatpush1.msra.mxu0 0.0
    %481 = vmatprep.mubr.f32.mxu0 0.0
    %482 = vmatmul.mubr.f32.gmra.mrb[0].mxu0 %v415
    %v483 = vpop.f32.mrb[0].mxu0
    %v484 = vadd.f32 %v100, %v483
    %v485 = vpop.f32.mrb[0].mxu0
    %v486 = vadd.f32 %v104, %v485
    %487 = vdwg.mxu0
    %v488 = vxor.u32 %v484, 2147483648
    %v489 = vxor.u32 %v486, 2147483648
    %v490 = vmul.f32 %v488, 1.442695
    %v491 = vpow.pop %v490
    %v492 = vmul.f32 %v489, 1.442695
    %v493 = vpow.pop %v492
    %v494 = vadd.f32 %v491, 1.0
    %v495 = vadd.f32 %v493, 1.0
    %v496 = vrcp.pop %v494
    %v497 = vmul.f32 1.0, %v496
    %v498 = vrcp.pop %v495
    %v499 = vmul.f32 1.0, %v498
    %v500 = vtanh.pop %v484
    %v501 = vtanh.pop %v486
    %v502 = vmul.f32 %v497, %v365
    %504 = vrot.lane.b32.xlu0 %v500, 64
    %v505 = vpop.permute.xlu0 %504
    %v507 = vmul.f32 %v497, %v505
    %509 = vrot.lane.b32.xlu0 %v507, 32
    %v510 = vpop.permute.xlu0 %509
    %v512 = vadd.f32 %v502, %v510
    %v513 = vtanh.pop %v512
    %515 = vrot.lane.b32.xlu0 %v513, 64
    %v516 = vpop.permute.xlu0 %515
    %v518 = vmul.f32 %v497, %v516
    %v519 = vmul.f32 %v499, %v382
    %521 = vrot.lane.b32.xlu0 %v501, 64
    %v522 = vpop.permute.xlu0 %521
    %v524 = vmul.f32 %v499, %v522
    %526 = vrot.lane.b32.xlu0 %v524, 32
    %v527 = vpop.permute.xlu0 %526
    %v529 = vadd.f32 %v519, %v527
    %v530 = vtanh.pop %v529
    %532 = vrot.lane.b32.xlu0 %v530, 64
    %v533 = vpop.permute.xlu0 %532
    %v535 = vmul.f32 %v499, %v533
    %537 = vrot.lane.b32.xlu0 %v518, 32
    %v538 = vpop.permute.xlu0 %537
    %540 = vst.msk [vmem:[#allocation3 + $0x8] sm:$0xf] %vm108, %v538
    %542 = vrot.lane.b32.xlu0 %v535, 32
    %v543 = vpop.permute.xlu0 %542
    %545 = vst.msk [vmem:[#allocation4 + $0x10] sm:$0xf0] %vm249, %v543
    %s546 = scalar_lea.vmem [#allocation5], 12
    %v547 = vld [vmem:[%s546] sm:$0xf]
    %548 = vst.msk [vmem:[#allocation2] sm:$0xf] %vm108, %v547
    %s549 = scalar_lea.vmem [#allocation5], 16
    %v550 = vld [vmem:[%s549] sm:$0xf]
    %551 = vst.msk [vmem:[#allocation2 + $0x4] sm:$0xf] %vm108, %v550
    %552 = vrot.lane.b32.xlu0 %v518, 64
    %v553 = vpop.permute.xlu0 %552
    %555 = vst.msk [vmem:[#allocation2] sm:$0xf] %vm113, %v553
    %556 = vrot.lane.b32.xlu0 %v535, 64
    %v557 = vpop.permute.xlu0 %556
    %559 = vst.msk [vmem:[#allocation2] sm:$0xf0] %vm264, %v557
    %v560 = vld [vmem:[#allocation2] sm:$0xff]
    %v562 = vsel %vm117, %v560, 0
    %564 = vmatprep.subr.mxu0 %v80
    %565 = vmatpush1.msra.mxu0 %v79
    %566 = vmatprep.subr.mxu0 %v82
    %567 = vmatpush1.msra.mxu0 %v81
    %568 = vmatprep.subr.mxu0 %v84
    %569 = vmatpush1.msra.mxu0 %v83
    %570 = vmatprep.subr.mxu0 %v86
    %571 = vmatpush1.msra.mxu0 %v85
    %572 = vmatprep.subr.mxu0 %v88
    %573 = vmatpush1.msra.mxu0 %v87
    %574 = vmatprep.subr.mxu0 %v90
    %575 = vmatpush1.msra.mxu0 %v89
    %576 = vmatprep.subr.mxu0 %v92
    %577 = vmatpush1.msra.mxu0 %v91
    %578 = vmatprep.subr.mxu0 %v94
    %579 = vmatpush1.msra.mxu0 %v93
    %580 = vmatprep.subr.mxu0 0.0
    %581 = vmatpush1.msra.mxu0 0.0
    %582 = vmatprep.subr.mxu0 0.0
    %583 = vmatpush1.msra.mxu0 0.0
    %584 = vmatprep.subr.mxu0 0.0
    %585 = vmatpush1.msra.mxu0 0.0
    %586 = vmatprep.subr.mxu0 0.0
    %587 = vmatpush1.msra.mxu0 0.0
    %588 = vmatprep.subr.mxu0 0.0
    %589 = vmatpush1.msra.mxu0 0.0
    %590 = vmatprep.subr.mxu0 0.0
    %591 = vmatpush1.msra.mxu0 0.0
    %592 = vmatprep.subr.mxu0 0.0
    %593 = vmatpush1.msra.mxu0 0.0
    %594 = vmatprep.subr.mxu0 0.0
    %595 = vmatpush1.msra.mxu0 0.0
    %596 = vmatprep.subr.mxu0 0.0
    %597 = vmatpush1.msra.mxu0 0.0
    %598 = vmatprep.subr.mxu0 0.0
    %599 = vmatpush1.msra.mxu0 0.0
    %600 = vmatprep.subr.mxu0 0.0
    %601 = vmatpush1.msra.mxu0 0.0
    %602 = vmatprep.subr.mxu0 0.0
    %603 = vmatpush1.msra.mxu0 0.0
    %604 = vmatprep.subr.mxu0 0.0
    %605 = vmatpush1.msra.mxu0 0.0
    %606 = vmatprep.subr.mxu0 0.0
    %607 = vmatpush1.msra.mxu0 0.0
    %608 = vmatprep.subr.mxu0 0.0
    %609 = vmatpush1.msra.mxu0 0.0
    %610 = vmatprep.subr.mxu0 0.0
    %611 = vmatpush1.msra.mxu0 0.0
    %612 = vmatprep.subr.mxu0 0.0
    %613 = vmatpush1.msra.mxu0 0.0
    %614 = vmatprep.subr.mxu0 0.0
    %615 = vmatpush1.msra.mxu0 0.0
    %616 = vmatprep.subr.mxu0 0.0
    %617 = vmatpush1.msra.mxu0 0.0
    %618 = vmatprep.subr.mxu0 0.0
    %619 = vmatpush1.msra.mxu0 0.0
    %620 = vmatprep.subr.mxu0 0.0
    %621 = vmatpush1.msra.mxu0 0.0
    %622 = vmatprep.subr.mxu0 0.0
    %623 = vmatpush1.msra.mxu0 0.0
    %624 = vmatprep.subr.mxu0 0.0
    %625 = vmatpush1.msra.mxu0 0.0
    %626 = vmatprep.subr.mxu0 0.0
    %627 = vmatpush1.msra.mxu0 0.0
    %628 = vmatprep.mubr.f32.mxu0 0.0
    %629 = vmatmul.mubr.f32.gmra.mrb[0].mxu0 %v562
    %v630 = vpop.f32.mrb[0].mxu0
    %v631 = vadd.f32 %v100, %v630
    %v632 = vpop.f32.mrb[0].mxu0
    %v633 = vadd.f32 %v104, %v632
    %634 = vdwg.mxu0
    %v635 = vxor.u32 %v631, 2147483648
    %v636 = vxor.u32 %v633, 2147483648
    %v637 = vmul.f32 %v635, 1.442695
    %v638 = vpow.pop %v637
    %v639 = vmul.f32 %v636, 1.442695
    %v640 = vpow.pop %v639
    %v641 = vadd.f32 %v638, 1.0
    %v642 = vadd.f32 %v640, 1.0
    %v643 = vrcp.pop %v641
    %v644 = vmul.f32 1.0, %v643
    %v645 = vrcp.pop %v642
    %v646 = vmul.f32 1.0, %v645
    %v647 = vtanh.pop %v631
    %v648 = vtanh.pop %v633
    %v649 = vmul.f32 %v644, %v512
    %651 = vrot.lane.b32.xlu0 %v647, 64
    %v652 = vpop.permute.xlu0 %651
    %v654 = vmul.f32 %v644, %v652
    %656 = vrot.lane.b32.xlu0 %v654, 32
    %v657 = vpop.permute.xlu0 %656
    %v659 = vadd.f32 %v649, %v657
    %v660 = vtanh.pop %v659
    %662 = vrot.lane.b32.xlu0 %v660, 64
    %v663 = vpop.permute.xlu0 %662
    %v665 = vmul.f32 %v644, %v663
    %v666 = vmul.f32 %v646, %v529
    %668 = vrot.lane.b32.xlu0 %v648, 64
    %v669 = vpop.permute.xlu0 %668
    %v671 = vmul.f32 %v646, %v669
    %673 = vrot.lane.b32.xlu0 %v671, 32
    %v674 = vpop.permute.xlu0 %673
    %v676 = vadd.f32 %v666, %v674
    %v677 = vtanh.pop %v676
    %679 = vrot.lane.b32.xlu0 %v677, 64
    %v680 = vpop.permute.xlu0 %679
    %v682 = vmul.f32 %v646, %v680
    %684 = vrot.lane.b32.xlu0 %v665, 32
    %v685 = vpop.permute.xlu0 %684
    %687 = vst.msk [vmem:[#allocation3 + $0xc] sm:$0xf] %vm108, %v685
    %689 = vrot.lane.b32.xlu0 %v682, 32
    %v690 = vpop.permute.xlu0 %689
    %692 = vst.msk [vmem:[#allocation4 + $0xc] sm:$0xf0] %vm249, %v690
    %v693 = vld [vmem:[%s549] sm:$0xf]
    %694 = vst.msk [vmem:[#allocation2] sm:$0xf] %vm108, %v693
    %v695 = vld [vmem:[%s546] sm:$0xf]
    %696 = vst.msk [vmem:[#allocation2 + $0x4] sm:$0xf] %vm108, %v695
    %697 = vrot.lane.b32.xlu0 %v665, 64
    %v698 = vpop.permute.xlu0 %697
    %700 = vst.msk [vmem:[#allocation2] sm:$0xf] %vm113, %v698
    %701 = vrot.lane.b32.xlu0 %v682, 64
    %v702 = vpop.permute.xlu0 %701
    %704 = vst.msk [vmem:[#allocation2] sm:$0xf0] %vm264, %v702
    %v705 = vld [vmem:[#allocation2] sm:$0xff]
    %v707 = vsel %vm117, %v705, 0
    %709 = vmatprep.subr.mxu0 %v80
    %710 = vmatpush1.msra.mxu0 %v79
    %711 = vmatprep.subr.mxu0 %v82
    %712 = vmatpush1.msra.mxu0 %v81
    %713 = vmatprep.subr.mxu0 %v84
    %714 = vmatpush1.msra.mxu0 %v83
    %715 = vmatprep.subr.mxu0 %v86
    %716 = vmatpush1.msra.mxu0 %v85
    %717 = vmatprep.subr.mxu0 %v88
    %718 = vmatpush1.msra.mxu0 %v87
    %719 = vmatprep.subr.mxu0 %v90
    %720 = vmatpush1.msra.mxu0 %v89
    %721 = vmatprep.subr.mxu0 %v92
    %722 = vmatpush1.msra.mxu0 %v91
    %723 = vmatprep.subr.mxu0 %v94
    %724 = vmatpush1.msra.mxu0 %v93
    %725 = vmatprep.subr.mxu0 0.0
    %726 = vmatpush1.msra.mxu0 0.0
    %727 = vmatprep.subr.mxu0 0.0
    %728 = vmatpush1.msra.mxu0 0.0
    %729 = vmatprep.subr.mxu0 0.0
    %730 = vmatpush1.msra.mxu0 0.0
    %731 = vmatprep.subr.mxu0 0.0
    %732 = vmatpush1.msra.mxu0 0.0
    %733 = vmatprep.subr.mxu0 0.0
    %734 = vmatpush1.msra.mxu0 0.0
    %735 = vmatprep.subr.mxu0 0.0
    %736 = vmatpush1.msra.mxu0 0.0
    %737 = vmatprep.subr.mxu0 0.0
    %738 = vmatpush1.msra.mxu0 0.0
    %739 = vmatprep.subr.mxu0 0.0
    %740 = vmatpush1.msra.mxu0 0.0
    %741 = vmatprep.subr.mxu0 0.0
    %742 = vmatpush1.msra.mxu0 0.0
    %743 = vmatprep.subr.mxu0 0.0
    %744 = vmatpush1.msra.mxu0 0.0
    %745 = vmatprep.subr.mxu0 0.0
    %746 = vmatpush1.msra.mxu0 0.0
    %747 = vmatprep.subr.mxu0 0.0
    %748 = vmatpush1.msra.mxu0 0.0
    %749 = vmatprep.subr.mxu0 0.0
    %750 = vmatpush1.msra.mxu0 0.0
    %751 = vmatprep.subr.mxu0 0.0
    %752 = vmatpush1.msra.mxu0 0.0
    %753 = vmatprep.subr.mxu0 0.0
    %754 = vmatpush1.msra.mxu0 0.0
    %755 = vmatprep.subr.mxu0 0.0
    %756 = vmatpush1.msra.mxu0 0.0
    %757 = vmatprep.subr.mxu0 0.0
    %758 = vmatpush1.msra.mxu0 0.0
    %759 = vmatprep.subr.mxu0 0.0
    %760 = vmatpush1.msra.mxu0 0.0
    %761 = vmatprep.subr.mxu0 0.0
    %762 = vmatpush1.msra.mxu0 0.0
    %763 = vmatprep.subr.mxu0 0.0
    %764 = vmatpush1.msra.mxu0 0.0
    %765 = vmatprep.subr.mxu0 0.0
    %766 = vmatpush1.msra.mxu0 0.0
    %767 = vmatprep.subr.mxu0 0.0
    %768 = vmatpush1.msra.mxu0 0.0
    %769 = vmatprep.subr.mxu0 0.0
    %770 = vmatpush1.msra.mxu0 0.0
    %771 = vmatprep.subr.mxu0 0.0
    %772 = vmatpush1.msra.mxu0 0.0
    %773 = vmatprep.mubr.f32.mxu0 0.0
    %774 = vmatmul.mubr.f32.gmra.mrb[0].mxu0 %v707
    %v775 = vpop.f32.mrb[0].mxu0
    %v776 = vadd.f32 %v100, %v775
    %v777 = vpop.f32.mrb[0].mxu0
    %v778 = vadd.f32 %v104, %v777
    %779 = vdwg.mxu0
    %v780 = vxor.u32 %v776, 2147483648
    %v781 = vxor.u32 %v778, 2147483648
    %v782 = vmul.f32 %v780, 1.442695
    %v783 = vpow.pop %v782
    %v784 = vmul.f32 %v781, 1.442695
    %v785 = vpow.pop %v784
    %v786 = vadd.f32 %v783, 1.0
    %v787 = vadd.f32 %v785, 1.0
    %v788 = vrcp.pop %v786
    %v789 = vmul.f32 1.0, %v788
    %v790 = vrcp.pop %v787
    %v791 = vmul.f32 1.0, %v790
    %v792 = vtanh.pop %v776
    %v793 = vtanh.pop %v778
    %v794 = vmul.f32 %v789, %v659
    %796 = vrot.lane.b32.xlu0 %v792, 64
    %v797 = vpop.permute.xlu0 %796
    %v799 = vmul.f32 %v789, %v797
    %801 = vrot.lane.b32.xlu0 %v799, 32
    %v802 = vpop.permute.xlu0 %801
    %v804 = vadd.f32 %v794, %v802
    %v805 = vtanh.pop %v804
    %807 = vrot.lane.b32.xlu0 %v805, 64
    %v808 = vpop.permute.xlu0 %807
    %v810 = vmul.f32 %v789, %v808
    %v811 = vmul.f32 %v791, %v676
    %813 = vrot.lane.b32.xlu0 %v793, 64
    %v814 = vpop.permute.xlu0 %813
    %v816 = vmul.f32 %v791, %v814
    %818 = vrot.lane.b32.xlu0 %v816, 32
    %v819 = vpop.permute.xlu0 %818
    %v821 = vadd.f32 %v811, %v819
    %v822 = vtanh.pop %v821
    %824 = vrot.lane.b32.xlu0 %v822, 64
    %v825 = vpop.permute.xlu0 %824
    %v827 = vmul.f32 %v791, %v825
    %829 = vrot.lane.b32.xlu0 %v810, 32
    %v830 = vpop.permute.xlu0 %829
    %832 = vst.msk [vmem:[#allocation3 + $0x10] sm:$0xf] %vm108, %v830
    %834 = vrot.lane.b32.xlu0 %v827, 32
    %v835 = vpop.permute.xlu0 %834
    %837 = vst.msk [vmem:[#allocation4 + $0x8] sm:$0xf0] %vm249, %v835
    %v838 = vld [vmem:[%s402] sm:$0xf]
    %839 = vst.msk [vmem:[#allocation2] sm:$0xf] %vm108, %v838
    %v840 = vld [vmem:[%s399] sm:$0xf]
    %841 = vst.msk [vmem:[#allocation2 + $0x4] sm:$0xf] %vm108, %v840
    %842 = vrot.lane.b32.xlu0 %v810, 64
    %v843 = vpop.permute.xlu0 %842
    %845 = vst.msk [vmem:[#allocation2] sm:$0xf] %vm113, %v843
    %846 = vrot.lane.b32.xlu0 %v827, 64
    %v847 = vpop.permute.xlu0 %846
    %849 = vst.msk [vmem:[#allocation2] sm:$0xf0] %vm264, %v847
    %v850 = vld [vmem:[#allocation2] sm:$0xff]
    %v852 = vsel %vm117, %v850, 0
    %854 = vmatprep.subr.mxu0 %v80
    %855 = vmatpush1.msra.mxu0 %v79
    %856 = vmatprep.subr.mxu0 %v82
    %857 = vmatpush1.msra.mxu0 %v81
    %858 = vmatprep.subr.mxu0 %v84
    %859 = vmatpush1.msra.mxu0 %v83
    %860 = vmatprep.subr.mxu0 %v86
    %861 = vmatpush1.msra.mxu0 %v85
    %862 = vmatprep.subr.mxu0 %v88
    %863 = vmatpush1.msra.mxu0 %v87
    %864 = vmatprep.subr.mxu0 %v90
    %865 = vmatpush1.msra.mxu0 %v89
    %866 = vmatprep.subr.mxu0 %v92
    %867 = vmatpush1.msra.mxu0 %v91
    %868 = vmatprep.subr.mxu0 %v94
    %869 = vmatpush1.msra.mxu0 %v93
    %870 = vmatprep.subr.mxu0 0.0
    %871 = vmatpush1.msra.mxu0 0.0
    %872 = vmatprep.subr.mxu0 0.0
    %873 = vmatpush1.msra.mxu0 0.0
    %874 = vmatprep.subr.mxu0 0.0
    %875 = vmatpush1.msra.mxu0 0.0
    %876 = vmatprep.subr.mxu0 0.0
    %877 = vmatpush1.msra.mxu0 0.0
    %878 = vmatprep.subr.mxu0 0.0
    %879 = vmatpush1.msra.mxu0 0.0
    %880 = vmatprep.subr.mxu0 0.0
    %881 = vmatpush1.msra.mxu0 0.0
    %882 = vmatprep.subr.mxu0 0.0
    %883 = vmatpush1.msra.mxu0 0.0
    %884 = vmatprep.subr.mxu0 0.0
    %885 = vmatpush1.msra.mxu0 0.0
    %886 = vmatprep.subr.mxu0 0.0
    %887 = vmatpush1.msra.mxu0 0.0
    %888 = vmatprep.subr.mxu0 0.0
    %889 = vmatpush1.msra.mxu0 0.0
    %890 = vmatprep.subr.mxu0 0.0
    %891 = vmatpush1.msra.mxu0 0.0
    %892 = vmatprep.subr.mxu0 0.0
    %893 = vmatpush1.msra.mxu0 0.0
    %894 = vmatprep.subr.mxu0 0.0
    %895 = vmatpush1.msra.mxu0 0.0
    %896 = vmatprep.subr.mxu0 0.0
    %897 = vmatpush1.msra.mxu0 0.0
    %898 = vmatprep.subr.mxu0 0.0
    %899 = vmatpush1.msra.mxu0 0.0
    %900 = vmatprep.subr.mxu0 0.0
    %901 = vmatpush1.msra.mxu0 0.0
    %902 = vmatprep.subr.mxu0 0.0
    %903 = vmatpush1.msra.mxu0 0.0
    %904 = vmatprep.subr.mxu0 0.0
    %905 = vmatpush1.msra.mxu0 0.0
    %906 = vmatprep.subr.mxu0 0.0
    %907 = vmatpush1.msra.mxu0 0.0
    %908 = vmatprep.subr.mxu0 0.0
    %909 = vmatpush1.msra.mxu0 0.0
    %910 = vmatprep.subr.mxu0 0.0
    %911 = vmatpush1.msra.mxu0 0.0
    %912 = vmatprep.subr.mxu0 0.0
    %913 = vmatpush1.msra.mxu0 0.0
    %914 = vmatprep.subr.mxu0 0.0
    %915 = vmatpush1.msra.mxu0 0.0
    %916 = vmatprep.subr.mxu0 0.0
    %917 = vmatpush1.msra.mxu0 0.0
    %918 = vmatprep.mubr.f32.mxu0 0.0
    %919 = vmatmul.mubr.f32.gmra.mrb[0].mxu0 %v852
    %v920 = vpop.f32.mrb[0].mxu0
    %v921 = vadd.f32 %v100, %v920
    %v922 = vpop.f32.mrb[0].mxu0
    %v923 = vadd.f32 %v104, %v922
    %924 = vdwg.mxu0
    %v925 = vxor.u32 %v921, 2147483648
    %v926 = vxor.u32 %v923, 2147483648
    %v927 = vmul.f32 %v925, 1.442695
    %v928 = vpow.pop %v927
    %v929 = vmul.f32 %v926, 1.442695
    %v930 = vpow.pop %v929
    %v931 = vadd.f32 %v928, 1.0
    %v932 = vadd.f32 %v930, 1.0
    %v933 = vrcp.pop %v931
    %v934 = vmul.f32 1.0, %v933
    %v935 = vrcp.pop %v932
    %v936 = vmul.f32 1.0, %v935
    %v937 = vtanh.pop %v921
    %v938 = vtanh.pop %v923
    %v939 = vmul.f32 %v934, %v804
    %941 = vrot.lane.b32.xlu0 %v937, 64
    %v942 = vpop.permute.xlu0 %941
    %v944 = vmul.f32 %v934, %v942
    %946 = vrot.lane.b32.xlu0 %v944, 32
    %v947 = vpop.permute.xlu0 %946
    %v949 = vadd.f32 %v939, %v947
    %v950 = vtanh.pop %v949
    %952 = vrot.lane.b32.xlu0 %v950, 64
    %v953 = vpop.permute.xlu0 %952
    %v955 = vmul.f32 %v934, %v953
    %v956 = vmul.f32 %v936, %v821
    %958 = vrot.lane.b32.xlu0 %v938, 64
    %v959 = vpop.permute.xlu0 %958
    %v961 = vmul.f32 %v936, %v959
    %963 = vrot.lane.b32.xlu0 %v961, 32
    %v964 = vpop.permute.xlu0 %963
    %v966 = vadd.f32 %v956, %v964
    %v967 = vtanh.pop %v966
    %969 = vrot.lane.b32.xlu0 %v967, 64
    %v970 = vpop.permute.xlu0 %969
    %v972 = vmul.f32 %v936, %v970
    %974 = vrot.lane.b32.xlu0 %v955, 32
    %v975 = vpop.permute.xlu0 %974
    %977 = vst.msk [vmem:[#allocation3 + $0x14] sm:$0xf] %vm108, %v975
    %979 = vrot.lane.b32.xlu0 %v972, 32
    %v980 = vpop.permute.xlu0 %979
    %982 = vst.msk [vmem:[#allocation4 + $0x4] sm:$0xf0] %vm249, %v980
    %v983 = vld [vmem:[%s254] sm:$0xf]
    %984 = vst.msk [vmem:[#allocation2] sm:$0xf] %vm108, %v983
    %v985 = vld [vmem:[%s251] sm:$0xf]
    %986 = vst.msk [vmem:[#allocation2 + $0x4] sm:$0xf] %vm108, %v985
    %987 = vrot.lane.b32.xlu0 %v955, 64
    %v988 = vpop.permute.xlu0 %987
    %990 = vst.msk [vmem:[#allocation2] sm:$0xf] %vm113, %v988
    %991 = vrot.lane.b32.xlu0 %v972, 64
    %v992 = vpop.permute.xlu0 %991
    %994 = vst.msk [vmem:[#allocation2] sm:$0xf0] %vm264, %v992
    %v995 = vld [vmem:[#allocation2] sm:$0xff]
    %v997 = vsel %vm117, %v995, 0
    %999 = vmatprep.subr.mxu0 %v80
    %1000 = vmatpush1.msra.mxu0 %v79
    %1001 = vmatprep.subr.mxu0 %v82
    %1002 = vmatpush1.msra.mxu0 %v81
    %1003 = vmatprep.subr.mxu0 %v84
    %1004 = vmatpush1.msra.mxu0 %v83
    %1005 = vmatprep.subr.mxu0 %v86
    %1006 = vmatpush1.msra.mxu0 %v85
    %1007 = vmatprep.subr.mxu0 %v88
    %1008 = vmatpush1.msra.mxu0 %v87
    %1009 = vmatprep.subr.mxu0 %v90
    %1010 = vmatpush1.msra.mxu0 %v89
    %1011 = vmatprep.subr.mxu0 %v92
    %1012 = vmatpush1.msra.mxu0 %v91
    %1013 = vmatprep.subr.mxu0 %v94
    %1014 = vmatpush1.msra.mxu0 %v93
    %1015 = vmatprep.subr.mxu0 0.0
    %1016 = vmatpush1.msra.mxu0 0.0
    %1017 = vmatprep.subr.mxu0 0.0
    %1018 = vmatpush1.msra.mxu0 0.0
    %1019 = vmatprep.subr.mxu0 0.0
    %1020 = vmatpush1.msra.mxu0 0.0
    %1021 = vmatprep.subr.mxu0 0.0
    %1022 = vmatpush1.msra.mxu0 0.0
    %1023 = vmatprep.subr.mxu0 0.0
    %1024 = vmatpush1.msra.mxu0 0.0
    %1025 = vmatprep.subr.mxu0 0.0
    %1026 = vmatpush1.msra.mxu0 0.0
    %1027 = vmatprep.subr.mxu0 0.0
    %1028 = vmatpush1.msra.mxu0 0.0
    %1029 = vmatprep.subr.mxu0 0.0
    %1030 = vmatpush1.msra.mxu0 0.0
    %1031 = vmatprep.subr.mxu0 0.0
    %1032 = vmatpush1.msra.mxu0 0.0
    %1033 = vmatprep.subr.mxu0 0.0
    %1034 = vmatpush1.msra.mxu0 0.0
    %1035 = vmatprep.subr.mxu0 0.0
    %1036 = vmatpush1.msra.mxu0 0.0
    %1037 = vmatprep.subr.mxu0 0.0
    %1038 = vmatpush1.msra.mxu0 0.0
    %1039 = vmatprep.subr.mxu0 0.0
    %1040 = vmatpush1.msra.mxu0 0.0
    %1041 = vmatprep.subr.mxu0 0.0
    %1042 = vmatpush1.msra.mxu0 0.0
    %1043 = vmatprep.subr.mxu0 0.0
    %1044 = vmatpush1.msra.mxu0 0.0
    %1045 = vmatprep.subr.mxu0 0.0
    %1046 = vmatpush1.msra.mxu0 0.0
    %1047 = vmatprep.subr.mxu0 0.0
    %1048 = vmatpush1.msra.mxu0 0.0
    %1049 = vmatprep.subr.mxu0 0.0
    %1050 = vmatpush1.msra.mxu0 0.0
    %1051 = vmatprep.subr.mxu0 0.0
    %1052 = vmatpush1.msra.mxu0 0.0
    %1053 = vmatprep.subr.mxu0 0.0
    %1054 = vmatpush1.msra.mxu0 0.0
    %1055 = vmatprep.subr.mxu0 0.0
    %1056 = vmatpush1.msra.mxu0 0.0
    %1057 = vmatprep.subr.mxu0 0.0
    %1058 = vmatpush1.msra.mxu0 0.0
    %1059 = vmatprep.subr.mxu0 0.0
    %1060 = vmatpush1.msra.mxu0 0.0
    %1061 = vmatprep.subr.mxu0 0.0
    %1062 = vmatpush1.msra.mxu0 0.0
    %1063 = vmatprep.mubr.f32.mxu0 0.0
    %1064 = vmatmul.mubr.f32.gmra.mrb[0].mxu0 %v997
    %v1065 = vpop.f32.mrb[0].mxu0
    %v1066 = vadd.f32 %v100, %v1065
    %v1067 = vpop.f32.mrb[0].mxu0
    %v1068 = vadd.f32 %v104, %v1067
    %1069 = vdwg.mxu0
    %v1070 = vxor.u32 %v1066, 2147483648
    %v1071 = vxor.u32 %v1068, 2147483648
    %v1072 = vmul.f32 %v1070, 1.442695
    %v1073 = vpow.pop %v1072
    %v1074 = vmul.f32 %v1071, 1.442695
    %v1075 = vpow.pop %v1074
    %v1076 = vadd.f32 %v1073, 1.0
    %v1077 = vadd.f32 %v1075, 1.0
    %v1078 = vrcp.pop %v1076
    %v1079 = vmul.f32 1.0, %v1078
    %v1080 = vrcp.pop %v1077
    %v1081 = vmul.f32 1.0, %v1080
    %v1082 = vtanh.pop %v1066
    %v1083 = vtanh.pop %v1068
    %v1084 = vmul.f32 %v1079, %v949
    %1086 = vrot.lane.b32.xlu0 %v1082, 64
    %v1087 = vpop.permute.xlu0 %1086
    %v1089 = vmul.f32 %v1079, %v1087
    %1091 = vrot.lane.b32.xlu0 %v1089, 32
    %v1092 = vpop.permute.xlu0 %1091
    %v1094 = vadd.f32 %v1084, %v1092
    %v1095 = vtanh.pop %v1094
    %1097 = vrot.lane.b32.xlu0 %v1095, 64
    %v1098 = vpop.permute.xlu0 %1097
    %v1100 = vmul.f32 %v1079, %v1098
    %v1101 = vmul.f32 %v1081, %v966
    %1103 = vrot.lane.b32.xlu0 %v1083, 64
    %v1104 = vpop.permute.xlu0 %1103
    %v1106 = vmul.f32 %v1081, %v1104
    %1108 = vrot.lane.b32.xlu0 %v1106, 32
    %v1109 = vpop.permute.xlu0 %1108
    %v1111 = vadd.f32 %v1101, %v1109
    %v1112 = vtanh.pop %v1111
    %1114 = vrot.lane.b32.xlu0 %v1112, 64
    %v1115 = vpop.permute.xlu0 %1114
    %v1117 = vmul.f32 %v1081, %v1115
    %1119 = vrot.lane.b32.xlu0 %v1100, 32
    %v1120 = vpop.permute.xlu0 %1119
    %1122 = vst.msk [vmem:[#allocation3 + $0x18] sm:$0xf] %vm108, %v1120
    %1124 = vrot.lane.b32.xlu0 %v1117, 32
    %v1125 = vpop.permute.xlu0 %1124
    %1127 = vst.msk [vmem:[#allocation4] sm:$0xf0] %vm249, %v1125
    %v1128 = vld [vmem:[%s110] sm:$0xf]
    %1129 = vst.msk [vmem:[#allocation2] sm:$0xf] %vm108, %v1128
    %v1130 = vld [vmem:[#allocation5] sm:$0xf]
    %1131 = vst.msk [vmem:[#allocation2 + $0x4] sm:$0xf] %vm108, %v1130
    %1132 = vrot.lane.b32.xlu0 %v1100, 64
    %v1133 = vpop.permute.xlu0 %1132
    %1135 = vst.msk [vmem:[#allocation2] sm:$0xf] %vm113, %v1133
    %1136 = vrot.lane.b32.xlu0 %v1117, 64
    %v1137 = vpop.permute.xlu0 %1136
    %1139 = vst.msk [vmem:[#allocation2] sm:$0xf0] %vm264, %v1137
    %v1140 = vld [vmem:[#allocation2] sm:$0xff]
    %v1142 = vsel %vm117, %v1140, 0
    %1144 = vmatprep.subr.mxu0 %v80
    %1145 = vmatpush1.msra.mxu0 %v79
    %1146 = vmatprep.subr.mxu0 %v82
    %1147 = vmatpush1.msra.mxu0 %v81
    %1148 = vmatprep.subr.mxu0 %v84
    %1149 = vmatpush1.msra.mxu0 %v83
    %1150 = vmatprep.subr.mxu0 %v86
    %1151 = vmatpush1.msra.mxu0 %v85
    %1152 = vmatprep.subr.mxu0 %v88
    %1153 = vmatpush1.msra.mxu0 %v87
    %1154 = vmatprep.subr.mxu0 %v90
    %1155 = vmatpush1.msra.mxu0 %v89
    %1156 = vmatprep.subr.mxu0 %v92
    %1157 = vmatpush1.msra.mxu0 %v91
    %1158 = vmatprep.subr.mxu0 %v94
    %1159 = vmatpush1.msra.mxu0 %v93
    %1160 = vmatprep.subr.mxu0 0.0
    %1161 = vmatpush1.msra.mxu0 0.0
    %1162 = vmatprep.subr.mxu0 0.0
    %1163 = vmatpush1.msra.mxu0 0.0
    %1164 = vmatprep.subr.mxu0 0.0
    %1165 = vmatpush1.msra.mxu0 0.0
    %1166 = vmatprep.subr.mxu0 0.0
    %1167 = vmatpush1.msra.mxu0 0.0
    %1168 = vmatprep.subr.mxu0 0.0
    %1169 = vmatpush1.msra.mxu0 0.0
    %1170 = vmatprep.subr.mxu0 0.0
    %1171 = vmatpush1.msra.mxu0 0.0
    %1172 = vmatprep.subr.mxu0 0.0
    %1173 = vmatpush1.msra.mxu0 0.0
    %1174 = vmatprep.subr.mxu0 0.0
    %1175 = vmatpush1.msra.mxu0 0.0
    %1176 = vmatprep.subr.mxu0 0.0
    %1177 = vmatpush1.msra.mxu0 0.0
    %1178 = vmatprep.subr.mxu0 0.0
    %1179 = vmatpush1.msra.mxu0 0.0
    %1180 = vmatprep.subr.mxu0 0.0
    %1181 = vmatpush1.msra.mxu0 0.0
    %1182 = vmatprep.subr.mxu0 0.0
    %1183 = vmatpush1.msra.mxu0 0.0
    %1184 = vmatprep.subr.mxu0 0.0
    %1185 = vmatpush1.msra.mxu0 0.0
    %1186 = vmatprep.subr.mxu0 0.0
    %1187 = vmatpush1.msra.mxu0 0.0
    %1188 = vmatprep.subr.mxu0 0.0
    %1189 = vmatpush1.msra.mxu0 0.0
    %1190 = vmatprep.subr.mxu0 0.0
    %1191 = vmatpush1.msra.mxu0 0.0
    %1192 = vmatprep.subr.mxu0 0.0
    %1193 = vmatpush1.msra.mxu0 0.0
    %1194 = vmatprep.subr.mxu0 0.0
    %1195 = vmatpush1.msra.mxu0 0.0
    %1196 = vmatprep.subr.mxu0 0.0
    %1197 = vmatpush1.msra.mxu0 0.0
    %1198 = vmatprep.subr.mxu0 0.0
    %1199 = vmatpush1.msra.mxu0 0.0
    %1200 = vmatprep.subr.mxu0 0.0
    %1201 = vmatpush1.msra.mxu0 0.0
    %1202 = vmatprep.subr.mxu0 0.0
    %1203 = vmatpush1.msra.mxu0 0.0
    %1204 = vmatprep.subr.mxu0 0.0
    %1205 = vmatpush1.msra.mxu0 0.0
    %1206 = vmatprep.subr.mxu0 0.0
    %1207 = vmatpush1.msra.mxu0 0.0
    %1208 = vmatprep.mubr.f32.mxu0 0.0
    %1209 = vmatmul.mubr.f32.gmra.mrb[0].mxu0 %v1142
    %v1210 = vpop.f32.mrb[0].mxu0
    %v1211 = vadd.f32 %v100, %v1210
    %v1212 = vpop.f32.mrb[0].mxu0
    %v1213 = vadd.f32 %v104, %v1212
    %1214 = vdwg.mxu0
    %v1215 = vxor.u32 %v1211, 2147483648
    %v1216 = vxor.u32 %v1213, 2147483648
    %v1217 = vmul.f32 %v1215, 1.442695
    %v1218 = vpow.pop %v1217
    %v1219 = vmul.f32 %v1216, 1.442695
    %v1220 = vpow.pop %v1219
    %v1221 = vadd.f32 %v1218, 1.0
    %v1222 = vadd.f32 %v1220, 1.0
    %v1223 = vrcp.pop %v1221
    %v1224 = vmul.f32 1.0, %v1223
    %v1225 = vrcp.pop %v1222
    %v1226 = vmul.f32 1.0, %v1225
    %v1227 = vtanh.pop %v1211
    %v1228 = vtanh.pop %v1213
    %v1229 = vmul.f32 %v1224, %v1094
    %1231 = vrot.lane.b32.xlu0 %v1227, 64
    %v1232 = vpop.permute.xlu0 %1231
    %v1234 = vmul.f32 %v1224, %v1232
    %1236 = vrot.lane.b32.xlu0 %v1234, 32
    %v1237 = vpop.permute.xlu0 %1236
    %v1239 = vadd.f32 %v1229, %v1237
    %v1240 = vtanh.pop %v1239
    %1242 = vrot.lane.b32.xlu0 %v1240, 64
    %v1243 = vpop.permute.xlu0 %1242
    %v1245 = vmul.f32 %v1224, %v1243
    %v1246 = vmul.f32 %v1226, %v1111
    %1248 = vrot.lane.b32.xlu0 %v1228, 64
    %v1249 = vpop.permute.xlu0 %1248
    %v1251 = vmul.f32 %v1226, %v1249
    %1253 = vrot.lane.b32.xlu0 %v1251, 32
    %v1254 = vpop.permute.xlu0 %1253
    %v1256 = vadd.f32 %v1246, %v1254
    %v1257 = vtanh.pop %v1256
    %1259 = vrot.lane.b32.xlu0 %v1257, 64
    %v1260 = vpop.permute.xlu0 %1259
    %v1262 = vmul.f32 %v1226, %v1260
    %1264 = vrot.lane.b32.xlu0 %v1245, 32
    %v1265 = vpop.permute.xlu0 %1264
    %1267 = vst.msk [vmem:[#allocation3 + $0x1c] sm:$0xf] %vm108, %v1265
    %1269 = vrot.lane.b32.xlu0 %v1262, 32
    %v1270 = vpop.permute.xlu0 %1269
    %1272 = vst.msk [vmem:[#allocation4 - $0x4] sm:$0xf0] %vm249, %v1270
    %v1273 = vld [vmem:[#allocation3] sm:$0xff]
    %v1274 = vld [vmem:[#allocation3 + $0x8] sm:$0xff]
    %v1275 = vld [vmem:[#allocation3 + $0x10] sm:$0xff]
    %v1276 = vld [vmem:[#allocation3 + $0x18] sm:$0xff]
    %v1277 = vld [vmem:[#allocation4] sm:$0xff]
    %v1278 = vld [vmem:[#allocation4 + $0x8] sm:$0xff]
    %v1279 = vld [vmem:[#allocation4 + $0x10] sm:$0xff]
    %v1280 = vld [vmem:[#allocation4 + $0x18] sm:$0xff]
    %v1281 = vld [vmem:[#allocation10] sm:$0xff]
    %v1282 = vld [vmem:[#allocation10 + $0x8] sm:$0xff]
    %v1283 = vld [vmem:[#allocation10 + $0x10] sm:$0xff]
    %v1284 = vld [vmem:[#allocation10 + $0x18] sm:$0xff]
    %v1285 = vld [vmem:[#allocation11] sm:$0xff]
    %v1286 = vld [vmem:[#allocation11 + $0x8] sm:$0xff]
    %v1287 = vld [vmem:[#allocation11 + $0x10] sm:$0xff]
    %v1288 = vld [vmem:[#allocation11 + $0x18] sm:$0xff]
    %vm1289 = vcmask 261120
    %v1291 = vsel %vm1289, %v1277, 0
    %v1294 = vsel %vm1289, %v1278, 0
    %v1297 = vsel %vm1289, %v1279, 0
    %v1300 = vsel %vm1289, %v1280, 0
    %1302 = vmatprep.subr.mxu0 0.0
    %1303 = vmatpush1.msra.mxu0 %v1285
    %1304 = vmatprep.subr.mxu0 0.0
    %1305 = vmatpush1.msra.mxu0 %v1286
    %1306 = vmatprep.subr.mxu0 0.0
    %1307 = vmatpush1.msra.mxu0 %v1287
    %1308 = vmatprep.subr.mxu0 0.0
    %1309 = vmatpush1.msra.mxu0 %v1288
    %1310 = vmatprep.subr.mxu0 0.0
    %1311 = vmatpush1.msra.mxu0 0.0
    %1312 = vmatprep.subr.mxu0 0.0
    %1313 = vmatpush1.msra.mxu0 0.0
    %1314 = vmatprep.subr.mxu0 0.0
    %1315 = vmatpush1.msra.mxu0 0.0
    %1316 = vmatprep.subr.mxu0 0.0
    %1317 = vmatpush1.msra.mxu0 0.0
    %1318 = vmatprep.subr.mxu0 0.0
    %1319 = vmatpush1.msra.mxu0 0.0
    %1320 = vmatprep.subr.mxu0 0.0
    %1321 = vmatpush1.msra.mxu0 0.0
    %1322 = vmatprep.subr.mxu0 0.0
    %1323 = vmatpush1.msra.mxu0 0.0
    %1324 = vmatprep.subr.mxu0 0.0
    %1325 = vmatpush1.msra.mxu0 0.0
    %1326 = vmatprep.subr.mxu0 0.0
    %1327 = vmatpush1.msra.mxu0 0.0
    %1328 = vmatprep.subr.mxu0 0.0
    %1329 = vmatpush1.msra.mxu0 0.0
    %1330 = vmatprep.subr.mxu0 0.0
    %1331 = vmatpush1.msra.mxu0 0.0
    %1332 = vmatprep.subr.mxu0 0.0
    %1333 = vmatpush1.msra.mxu0 0.0
    %1334 = vmatprep.subr.mxu0 0.0
    %1335 = vmatpush1.msra.mxu0 0.0
    %1336 = vmatprep.subr.mxu0 0.0
    %1337 = vmatpush1.msra.mxu0 0.0
    %1338 = vmatprep.subr.mxu0 0.0
    %1339 = vmatpush1.msra.mxu0 0.0
    %1340 = vmatprep.subr.mxu0 0.0
    %1341 = vmatpush1.msra.mxu0 0.0
    %1342 = vmatprep.subr.mxu0 0.0
    %1343 = vmatpush1.msra.mxu0 0.0
    %1344 = vmatprep.subr.mxu0 0.0
    %1345 = vmatpush1.msra.mxu0 0.0
    %1346 = vmatprep.subr.mxu0 0.0
    %1347 = vmatpush1.msra.mxu0 0.0
    %1348 = vmatprep.subr.mxu0 0.0
    %1349 = vmatpush1.msra.mxu0 0.0
    %1350 = vmatprep.subr.mxu0 0.0
    %1351 = vmatpush1.msra.mxu0 0.0
    %1352 = vmatprep.subr.mxu0 0.0
    %1353 = vmatpush1.msra.mxu0 0.0
    %1354 = vmatprep.subr.mxu0 0.0
    %1355 = vmatpush1.msra.mxu0 0.0
    %1356 = vmatprep.subr.mxu0 0.0
    %1357 = vmatpush1.msra.mxu0 0.0
    %1358 = vmatprep.subr.mxu0 0.0
    %1359 = vmatpush1.msra.mxu0 0.0
    %1360 = vmatprep.subr.mxu0 0.0
    %1361 = vmatpush1.msra.mxu0 0.0
    %1362 = vmatprep.subr.mxu0 0.0
    %1363 = vmatpush1.msra.mxu0 0.0
    %1364 = vmatprep.subr.mxu0 0.0
    %1365 = vmatpush1.msra.mxu0 0.0
    %1366 = vmatprep.mubr.f32.mxu0 0.0
    %1367 = vmatmul.mubr.f32.gmra.mrb[0].mxu0 %v1291
    %v1368 = vpop.f32.mrb[0].mxu0
    %v1369 = vadd.f32 0.0, %v1368
    %v1370 = vpop.f32.mrb[0].mxu0
    %1371 = vmatprep.mubr.f32.mxu0 0.0
    %1372 = vmatmul.mubr.f32.gmra.mrb[0].mxu0 %v1294
    %v1373 = vpop.f32.mrb[0].mxu0
    %v1374 = vadd.f32 0.0, %v1373
    %v1375 = vpop.f32.mrb[0].mxu0
    %1376 = vmatprep.mubr.f32.mxu0 0.0
    %1377 = vmatmul.mubr.f32.gmra.mrb[0].mxu0 %v1297
    %v1378 = vpop.f32.mrb[0].mxu0
    %v1379 = vadd.f32 0.0, %v1378
    %v1380 = vpop.f32.mrb[0].mxu0
    %1381 = vmatprep.mubr.f32.mxu0 0.0
    %1382 = vmatmul.mubr.f32.gmra.mrb[0].mxu0 %v1300
    %v1383 = vpop.f32.mrb[0].mxu0
    %v1384 = vadd.f32 0.0, %v1383
    %v1385 = vpop.f32.mrb[0].mxu0
    %1386 = vdwg.mxu0
    %v1388 = vsel %vm1289, %v1273, 0
    %v1391 = vsel %vm1289, %v1274, 0
    %v1394 = vsel %vm1289, %v1275, 0
    %v1397 = vsel %vm1289, %v1276, 0
    %1399 = vmatprep.subr.mxu0 0.0
    %1400 = vmatpush1.msra.mxu0 %v1281
    %1401 = vmatprep.subr.mxu0 0.0
    %1402 = vmatpush1.msra.mxu0 %v1282
    %1403 = vmatprep.subr.mxu0 0.0
    %1404 = vmatpush1.msra.mxu0 %v1283
    %1405 = vmatprep.subr.mxu0 0.0
    %1406 = vmatpush1.msra.mxu0 %v1284
    %1407 = vmatprep.subr.mxu0 0.0
    %1408 = vmatpush1.msra.mxu0 0.0
    %1409 = vmatprep.subr.mxu0 0.0
    %1410 = vmatpush1.msra.mxu0 0.0
    %1411 = vmatprep.subr.mxu0 0.0
    %1412 = vmatpush1.msra.mxu0 0.0
    %1413 = vmatprep.subr.mxu0 0.0
    %1414 = vmatpush1.msra.mxu0 0.0
    %1415 = vmatprep.subr.mxu0 0.0
    %1416 = vmatpush1.msra.mxu0 0.0
    %1417 = vmatprep.subr.mxu0 0.0
    %1418 = vmatpush1.msra.mxu0 0.0
    %1419 = vmatprep.subr.mxu0 0.0
    %1420 = vmatpush1.msra.mxu0 0.0
    %1421 = vmatprep.subr.mxu0 0.0
    %1422 = vmatpush1.msra.mxu0 0.0
    %1423 = vmatprep.subr.mxu0 0.0
    %1424 = vmatpush1.msra.mxu0 0.0
    %1425 = vmatprep.subr.mxu0 0.0
    %1426 = vmatpush1.msra.mxu0 0.0
    %1427 = vmatprep.subr.mxu0 0.0
    %1428 = vmatpush1.msra.mxu0 0.0
    %1429 = vmatprep.subr.mxu0 0.0
    %1430 = vmatpush1.msra.mxu0 0.0
    %1431 = vmatprep.subr.mxu0 0.0
    %1432 = vmatpush1.msra.mxu0 0.0
    %1433 = vmatprep.subr.mxu0 0.0
    %1434 = vmatpush1.msra.mxu0 0.0
    %1435 = vmatprep.subr.mxu0 0.0
    %1436 = vmatpush1.msra.mxu0 0.0
    %1437 = vmatprep.subr.mxu0 0.0
    %1438 = vmatpush1.msra.mxu0 0.0
    %1439 = vmatprep.subr.mxu0 0.0
    %1440 = vmatpush1.msra.mxu0 0.0
    %1441 = vmatprep.subr.mxu0 0.0
    %1442 = vmatpush1.msra.mxu0 0.0
    %1443 = vmatprep.subr.mxu0 0.0
    %1444 = vmatpush1.msra.mxu0 0.0
    %1445 = vmatprep.subr.mxu0 0.0
    %1446 = vmatpush1.msra.mxu0 0.0
    %1447 = vmatprep.subr.mxu0 0.0
    %1448 = vmatpush1.msra.mxu0 0.0
    %1449 = vmatprep.subr.mxu0 0.0
    %1450 = vmatpush1.msra.mxu0 0.0
    %1451 = vmatprep.subr.mxu0 0.0
    %1452 = vmatpush1.msra.mxu0 0.0
    %1453 = vmatprep.subr.mxu0 0.0
    %1454 = vmatpush1.msra.mxu0 0.0
    %1455 = vmatprep.subr.mxu0 0.0
    %1456 = vmatpush1.msra.mxu0 0.0
    %1457 = vmatprep.subr.mxu0 0.0
    %1458 = vmatpush1.msra.mxu0 0.0
    %1459 = vmatprep.subr.mxu0 0.0
    %1460 = vmatpush1.msra.mxu0 0.0
    %1461 = vmatprep.subr.mxu0 0.0
    %1462 = vmatpush1.msra.mxu0 0.0
    %1463 = vmatprep.mubr.f32.mxu0 0.0
    %1464 = vmatmul.mubr.f32.gmra.mrb[0].mxu0 %v1388
    %v1465 = vpop.f32.mrb[0].mxu0
    %v1466 = vadd.f32 %v1369, %v1465
    %v1467 = vpop.f32.mrb[0].mxu0
    %1468 = vmatprep.mubr.f32.mxu0 0.0
    %1469 = vmatmul.mubr.f32.gmra.mrb[0].mxu0 %v1391
    %v1470 = vpop.f32.mrb[0].mxu0
    %v1471 = vadd.f32 %v1374, %v1470
    %v1472 = vpop.f32.mrb[0].mxu0
    %1473 = vmatprep.mubr.f32.mxu0 0.0
    %1474 = vmatmul.mubr.f32.gmra.mrb[0].mxu0 %v1394
    %v1475 = vpop.f32.mrb[0].mxu0
    %v1476 = vadd.f32 %v1379, %v1475
    %v1477 = vpop.f32.mrb[0].mxu0
    %1478 = vmatprep.mubr.f32.mxu0 0.0
    %1479 = vmatmul.mubr.f32.gmra.mrb[0].mxu0 %v1397
    %v1480 = vpop.f32.mrb[0].mxu0
    %v1481 = vadd.f32 %v1384, %v1480
    %v1482 = vpop.f32.mrb[0].mxu0
    %1483 = vdwg.mxu0
    %v1484 = vld [vmem:[%s5] sm:$0x1]
    %v1486 = vlaneseq
    %v1487 = vshrl.u32 %v1486, 7
    %v1488 = vsub.s32 0, %v1487
    %v1489 = vrot.slane %v1484, %v1488
    %v1491 = vadd.f32 %v1466, %v1489
    %v1492 = vadd.f32 %v1471, %v1489
    %v1493 = vadd.f32 %v1476, %v1489
    %v1494 = vadd.f32 %v1481, %v1489
    %1495 = vst [vmem:[#allocation13] sm:$0xff] %v1491
    %1496 = vst [vmem:[#allocation13 + $0x8] sm:$0xff] %v1492
    %1497 = vst [vmem:[#allocation13 + $0x10] sm:$0xff] %v1493
    %1498 = vst [vmem:[#allocation13 + $0x18] sm:$0xff] %v1494
    // Predicated region
    $region42: #{tpu_custom_call.1} parent=1 // pred_check
      _
    $region43: #{tpu_custom_call.1} parent=1 // pred_check_branch
      %1500 = sbr.rel (0) target = $region45
    $region44: #{tpu_custom_call.1} parent=1 // pred_region
      %s1502 = ssub.s32 512, 512
      %1503 = vsyncadd [#allocation7], %s1502
      %s1504 = sshll.u32 [#allocation13], 4
      %s1505 = int_to_ptr.vmem [resolvable:$true] %s1504
      %1510 = dma.vmem_to_hbm [thread:$0]  %s1505, 512, %s6, [#allocation7], 128, 128, 8
    $region45: #{tpu_custom_call.1} parent=1 // pred_fallthru
      _
    // Predicated region
    $region46: #{tpu_custom_call.1} parent=1 // pred_check
      _
    $region47: #{tpu_custom_call.1} parent=1 // pred_check_branch
      %1512 = sbr.rel (0) target = $region49
    $region48: #{tpu_custom_call.1} parent=1 // pred_region
      %1513 = dma.done [#allocation7], 512
    $region49: #{tpu_custom_call.1} parent=1 // pred_fallthru
      _
    %1514 = vsyncpa [#allocation6], 1
    %1515 = vsyncpa [#allocation9], 1
    %1516 = vsyncpa [#allocation12], 1
    %1517 = vsyncpa [#allocation7], 1

</llo_original>
